<compile_context>
chip_gen: v5e
topology: v5e:2x2
jax: 0.10.0
libtpu: 0.0.40
codegen_flags: <defaults>
</compile_context>

<pallas_src>
import functools
import math

import jax
import jax.numpy as jnp
from jax.experimental import pallas as pl
from jax.experimental.pallas import tpu as pltpu


# ----------------------------- fused Pallas kernel -------------------------- #

def _fused_stream_kernel(x_ref, xo_ref, wq_ref, bq_ref, wkv_ref, bkv_ref,
                         wo_ref, bo_ref, o_ref, *, num_heads, hidden, scale):
    # Per grid point (stream s, batch n):
    #   x_ref   : (C, L)          this stream's input (also the residual)
    #   xo_ref  : ((S-1)*C, L)    other streams' inputs, channel-concatenated
    #   wq_ref  : (HD, (S-1)*C)   other streams' q-embed weights, concatenated
    #   bq_ref  : (HD, 1)         sum of other streams' q biases
    #   wkv_ref : (2*HD, C)       this stream's k & v embed weights
    #   bkv_ref : (2*HD, 1)
    #   wo_ref  : (C, HD)         output conv-transpose weight, pre-transposed
    #   bo_ref  : (C, 1)
    #   o_ref   : (C, L)
    HD = num_heads * hidden
    x = x_ref[...].astype(jnp.float32)
    xo = xo_ref[...].astype(jnp.float32)

    # 1x1 "convs" as channel-first matmuls (lane-dense along L).
    # q already contains the cross-stream sum: concat-W @ concat-x + sum-bias.
    q = jnp.dot(wq_ref[...], xo, preferred_element_type=jnp.float32) + bq_ref[...]
    kv = jnp.dot(wkv_ref[...], x, preferred_element_type=jnp.float32) + bkv_ref[...]
    k = kv[:HD]
    v = kv[HD:]

    o_heads = []
    for h in range(num_heads):                      # static unrolled loop
        qh = q[h * hidden:(h + 1) * hidden]         # (D, L)
        kh = k[h * hidden:(h + 1) * hidden]         # (D, L)
        vh = v[h * hidden:(h + 1) * hidden]         # (D, L)
        # scores laid out (Lk, Lq): softmax stats land as (1, Lq) rows that
        # broadcast along lanes for the following (D, Lq) ops.
        s = jax.lax.dot_general(kh, qh, (((0,), (0,)), ((), ())),
                                preferred_element_type=jnp.float32) * scale
        m = jnp.max(s, axis=0, keepdims=True)       # (1, Lq)
        e = jnp.exp(s - m)                          # (Lk, Lq), unnormalized
        denom = jnp.sum(e, axis=0, keepdims=True)   # (1, Lq)
        # Deferred normalization: scale the small (D, Lq) result instead of
        # dividing the (Lk, Lq) matrix; approx reciprocal rides the EUP slot.
        oh = jnp.dot(vh, e, preferred_element_type=jnp.float32)   # (D, Lq)
        oh = oh * pl.reciprocal(denom, approx=True)
        o_heads.append(oh)
    o_cat = jnp.concatenate(o_heads, axis=0)        # (HD, Lq)

    out = (jnp.dot(wo_ref[...], o_cat, preferred_element_type=jnp.float32)
           + bo_ref[...] + x)                       # fused bias + residual
    o_ref[...] = out.astype(o_ref.dtype)


# ------------------------------ module forward ------------------------------ #

def mutual_nonlocal_forward(xs, params, num_heads, hidden_channels):
    S = len(xs)
    N, C, H, W = xs[0].shape
    L = H * W
    HD = num_heads * hidden_channels

    # NCHW -> (S, N, C, L): channel-first, L is the lane-dense axis.
    x_all = jnp.stack([x.reshape(N, C, L) for x in xs])
    # For stream s: all *other* streams' inputs concatenated along channels.
    x_others = jnp.stack([
        jnp.concatenate([x_all[t] for t in range(S) if t != s], axis=1)
        for s in range(S)])                                   # (S, N, (S-1)*C, L)

    # Split each stream's embed weight into q / (k,v) blocks.
    # PyTorch: embed.chunk(3, dim=1) -> blocked [all-q | all-k | all-v],
    # then .view(N, heads, D, -1) -> per-head blocks of D channels.
    wq_s, bq_s, wkv_s, bkv_s = [], [], [], []
    for s in range(S):
        we = params["embed_w"][s].reshape(3 * HD, C)
        be = params["embed_b"][s]
        wq_s.append(we[:HD])
        bq_s.append(be[:HD])
        wkv_s.append(we[HD:])
        bkv_s.append(be[HD:])

    wq_all = jnp.stack([
        jnp.concatenate([wq_s[t] for t in range(S) if t != s], axis=1)
        for s in range(S)])                                   # (S, HD, (S-1)*C)
    bq_all = jnp.stack([
        sum(bq_s[t] for t in range(S) if t != s) for s in range(S)
    ]).reshape(S, HD, 1)
    wkv_all = jnp.stack(wkv_s)                                # (S, 2*HD, C)
    bkv_all = jnp.stack(bkv_s).reshape(S, 2 * HD, 1)
    # ConvTranspose2d weight (Ct, C, 1, 1): out = W^T @ qkv + b.
    woT_all = jnp.stack([params["out_w"][s].reshape(HD, C).T for s in range(S)])
    bo_all = jnp.stack(params["out_b"]).reshape(S, C, 1)

    CO = (S - 1) * C
    kernel = functools.partial(_fused_stream_kernel,
                               num_heads=num_heads,
                               hidden=hidden_channels,
                               scale=1.0 / math.sqrt(hidden_channels))

    def xmap(s, n):
        return (s, n, 0, 0)

    def wmap(s, n):
        return (s, 0, 0)

    out_all = pl.pallas_call(
        kernel,
        out_shape=jax.ShapeDtypeStruct((S, N, C, L), xs[0].dtype),
        grid=(S, N),
        in_specs=[
            pl.BlockSpec((None, None, C, L), xmap),     # x (stream s)
            pl.BlockSpec((None, None, CO, L), xmap),    # x (other streams)
            pl.BlockSpec((None, HD, CO), wmap),         # Wq (others, concat)
            pl.BlockSpec((None, HD, 1), wmap),          # bq (others, summed)
            pl.BlockSpec((None, 2 * HD, C), wmap),      # Wk|Wv
            pl.BlockSpec((None, 2 * HD, 1), wmap),      # bk|bv
            pl.BlockSpec((None, C, HD), wmap),          # Wout^T
            pl.BlockSpec((None, C, 1), wmap),           # bout
        ],
        out_specs=pl.BlockSpec((None, None, C, L), xmap),
        compiler_params=pltpu.CompilerParams(
            dimension_semantics=("parallel", "parallel"),
            vmem_limit_bytes=32 * 1024 * 1024),
    )(x_all, x_others, wq_all, bq_all, wkv_all, bkv_all, woT_all, bo_all)

    return [out_all[s].reshape(N, C, H, W) for s in range(S)]


# ------------------------------- parameters --------------------------------- #

def init_params(key, num_streams, in_channels, hidden_channels, num_heads):
    Ce = 3 * hidden_channels * num_heads          # embed conv out channels
    Ct = hidden_channels * num_heads              # output conv-transpose in channels
    keys = jax.random.split(key, 2 * num_streams)
    params = {"embed_w": [], "embed_b": [], "out_w": [], "out_b": []}
    for s in range(num_streams):
        # kaiming_normal_(mode='fan_out', nonlinearity='relu'), bias = 0
        std_e = math.sqrt(2.0 / (Ce * 1 * 1))
        params["embed_w"].append(
            std_e * jax.random.normal(keys[2 * s], (Ce, in_channels, 1, 1), jnp.float32))
        params["embed_b"].append(jnp.zeros((Ce,), jnp.float32))
        std_o = math.sqrt(2.0 / (Ct * 1 * 1))
        params["out_w"].append(
            std_o * jax.random.normal(keys[2 * s + 1], (Ct, in_channels, 1, 1), jnp.float32))
        params["out_b"].append(jnp.zeros((in_channels,), jnp.float32))
    return params


# ----------------------- pure-JAX reference (check) ------------------------- #

def reference_forward(xs, params, num_heads, hidden_channels):
    num_streams = len(xs)
    N, C, H, W = xs[0].shape
    L = H * W
    qs, ks, vs = [], [], []
    for s in range(num_streams):
        x = xs[s].reshape(N, C, L)
        w = params["embed_w"][s].reshape(-1, C)
        b = params["embed_b"][s]
        emb = jnp.einsum("oc,ncl->nol", w, x) + b[None, :, None]
        q, k, v = jnp.split(emb, 3, axis=1)
        qs.append(q.reshape(N, num_heads, hidden_channels, L))
        ks.append(k.reshape(N, num_heads, hidden_channels, L))
        vs.append(v.reshape(N, num_heads, hidden_channels, L))
    scale = 1.0 / math.sqrt(hidden_channels)
    outs = []
    for s in range(num_streams):
        q = sum(qs[t] for t in range(num_streams) if t != s)
        scores = jnp.einsum("nhdi,nhdj->nhij", q, ks[s]) * scale
        p = jax.nn.softmax(scores, axis=-1)
        o = jnp.einsum("nhdj,nhij->nhdi", vs[s], p)
        o = o.reshape(N, num_heads * hidden_channels, L)
        wt = params["out_w"][s].reshape(num_heads * hidden_channels, C)
        bt = params["out_b"][s]
        out = jnp.einsum("io,nil->nol", wt, o) + bt[None, :, None]
        outs.append(out.reshape(N, C, H, W) + xs[s])
    return outs


# ---------------------------------- main ------------------------------------ #

if __name__ == "__main__":
    key = jax.random.PRNGKey(0)
    N, C, H, W = 2, 4, 16, 16
    num_streams, num_heads, hidden_channels = 2, 2, 8

    k_param, k_x0, k_x1 = jax.random.split(key, 3)
    xs = [jax.random.normal(k_x0, (N, C, H, W), jnp.float32),
          jax.random.normal(k_x1, (N, C, H, W), jnp.float32)]
    params = init_params(k_param, num_streams, C, hidden_channels, num_heads)

    outs = mutual_nonlocal_forward(xs, params, num_heads, hidden_channels)
    for o in outs:
        jax.block_until_ready(o)

    refs = reference_forward(xs, params, num_heads, hidden_channels)
    for o, r in zip(outs, refs):
        assert o.shape == r.shape and o.dtype == r.dtype
        assert jnp.allclose(o, r, atol=5e-3, rtol=5e-3), "mismatch vs reference"

    print("KERNEL_OK")
</pallas_src>

<mosaic_0001>
module attributes {stable_mosaic.version = 11 : i64} {
  func.func @_fused_stream_kernel(%arg0: i32, %arg1: i32, %arg2: memref<1x1x4x256xf32, #tpu.memory_space<vmem>>, %arg3: memref<1x1x4x256xf32, #tpu.memory_space<vmem>>, %arg4: memref<1x16x4xf32, #tpu.memory_space<vmem>>, %arg5: memref<1x16x1xf32, #tpu.memory_space<vmem>>, %arg6: memref<1x32x4xf32, #tpu.memory_space<vmem>>, %arg7: memref<1x32x1xf32, #tpu.memory_space<vmem>>, %arg8: memref<1x4x16xf32, #tpu.memory_space<vmem>>, %arg9: memref<1x4x1xf32, #tpu.memory_space<vmem>>, %arg10: memref<1x1x4x256xf32, #tpu.memory_space<vmem>>) attributes {dimension_semantics = [#tpu.dimension_semantics<parallel>, #tpu.dimension_semantics<parallel>], iteration_bounds = array<i64: 2, 2>, scalar_prefetch = 0 : i64, scratch_operands = 0 : i64, tpu.core_type = #tpu.core_type<tc>, window_params = [{transform_indices = @transform_0, window_bounds = array<i64: 1, 1, 4, 256>}, {transform_indices = @transform_1, window_bounds = array<i64: 1, 1, 4, 256>}, {transform_indices = @transform_2, window_bounds = array<i64: 1, 16, 4>}, {transform_indices = @transform_3, window_bounds = array<i64: 1, 16, 1>}, {transform_indices = @transform_4, window_bounds = array<i64: 1, 32, 4>}, {transform_indices = @transform_5, window_bounds = array<i64: 1, 32, 1>}, {transform_indices = @transform_6, window_bounds = array<i64: 1, 4, 16>}, {transform_indices = @transform_7, window_bounds = array<i64: 1, 4, 1>}, {transform_indices = @transform_8, window_bounds = array<i64: 1, 1, 4, 256>}]} {
    %c0 = arith.constant 0 : index
    %c0_0 = arith.constant 0 : index
    %c0_1 = arith.constant 0 : index
    %c0_2 = arith.constant 0 : index
    %0 = vector.load %arg2[%c0, %c0_0, %c0_1, %c0_2] : memref<1x1x4x256xf32, #tpu.memory_space<vmem>>, vector<1x1x4x256xf32>
    %1 = vector.shape_cast %0 : vector<1x1x4x256xf32> to vector<4x256xf32>
    %c0_3 = arith.constant 0 : index
    %c0_4 = arith.constant 0 : index
    %c0_5 = arith.constant 0 : index
    %c0_6 = arith.constant 0 : index
    %2 = vector.load %arg3[%c0_3, %c0_4, %c0_5, %c0_6] : memref<1x1x4x256xf32, #tpu.memory_space<vmem>>, vector<1x1x4x256xf32>
    %3 = vector.shape_cast %2 : vector<1x1x4x256xf32> to vector<4x256xf32>
    %c0_7 = arith.constant 0 : index
    %c0_8 = arith.constant 0 : index
    %c0_9 = arith.constant 0 : index
    %4 = vector.load %arg4[%c0_7, %c0_8, %c0_9] : memref<1x16x4xf32, #tpu.memory_space<vmem>>, vector<1x16x4xf32>
    %5 = vector.shape_cast %4 : vector<1x16x4xf32> to vector<16x4xf32>
    %cst = arith.constant dense<0.000000e+00> : vector<16x256xf32>
    %6 = tpu.matmul %5, %3, %cst {dimension_numbers = #tpu.dot_dimension_numbers<[1], [0], [0], [1], [0, 0, 1, 1], [], []>} : vector<16x4xf32>, vector<4x256xf32>, vector<16x256xf32> -> vector<16x256xf32>
    %c0_10 = arith.constant 0 : index
    %c0_11 = arith.constant 0 : index
    %c0_12 = arith.constant 0 : index
    %7 = vector.load %arg5[%c0_10, %c0_11, %c0_12] : memref<1x16x1xf32, #tpu.memory_space<vmem>>, vector<1x16x1xf32>
    %8 = vector.shape_cast %7 : vector<1x16x1xf32> to vector<16x1xf32>
    %9 = vector.broadcast %8 : vector<16x1xf32> to vector<16x256xf32>
    %10 = arith.addf %6, %9 : vector<16x256xf32>
    %c0_13 = arith.constant 0 : index
    %c0_14 = arith.constant 0 : index
    %c0_15 = arith.constant 0 : index
    %11 = vector.load %arg6[%c0_13, %c0_14, %c0_15] : memref<1x32x4xf32, #tpu.memory_space<vmem>>, vector<1x32x4xf32>
    %12 = vector.shape_cast %11 : vector<1x32x4xf32> to vector<32x4xf32>
    %cst_16 = arith.constant dense<0.000000e+00> : vector<32x256xf32>
    %13 = tpu.matmul %12, %1, %cst_16 {dimension_numbers = #tpu.dot_dimension_numbers<[1], [0], [0], [1], [0, 0, 1, 1], [], []>} : vector<32x4xf32>, vector<4x256xf32>, vector<32x256xf32> -> vector<32x256xf32>
    %c0_17 = arith.constant 0 : index
    %c0_18 = arith.constant 0 : index
    %c0_19 = arith.constant 0 : index
    %14 = vector.load %arg7[%c0_17, %c0_18, %c0_19] : memref<1x32x1xf32, #tpu.memory_space<vmem>>, vector<1x32x1xf32>
    %15 = vector.shape_cast %14 : vector<1x32x1xf32> to vector<32x1xf32>
    %16 = vector.broadcast %15 : vector<32x1xf32> to vector<32x256xf32>
    %17 = arith.addf %13, %16 : vector<32x256xf32>
    %18 = vector.extract_strided_slice %17 {offsets = [0, 0], sizes = [16, 256], strides = [1, 1]} : vector<32x256xf32> to vector<16x256xf32>
    %19 = vector.extract_strided_slice %17 {offsets = [16, 0], sizes = [16, 256], strides = [1, 1]} : vector<32x256xf32> to vector<16x256xf32>
    %20 = vector.extract_strided_slice %10 {offsets = [0, 0], sizes = [8, 256], strides = [1, 1]} : vector<16x256xf32> to vector<8x256xf32>
    %21 = vector.extract_strided_slice %18 {offsets = [0, 0], sizes = [8, 256], strides = [1, 1]} : vector<16x256xf32> to vector<8x256xf32>
    %22 = vector.extract_strided_slice %19 {offsets = [0, 0], sizes = [8, 256], strides = [1, 1]} : vector<16x256xf32> to vector<8x256xf32>
    %cst_20 = arith.constant dense<0.000000e+00> : vector<256x256xf32>
    %23 = tpu.matmul %21, %20, %cst_20 {dimension_numbers = #tpu.dot_dimension_numbers<[0], [0], [1], [1], [0, 1, 1, 1], [], []>} : vector<8x256xf32>, vector<8x256xf32>, vector<256x256xf32> -> vector<256x256xf32>
    %cst_21 = arith.constant 0.353553385 : f32
    %24 = vector.broadcast %cst_21 : f32 to vector<256x256xf32>
    %25 = arith.mulf %23, %24 : vector<256x256xf32>
    %cst_22 = arith.constant dense<0xFF800000> : vector<256xf32>
    %26 = vector.multi_reduction <maximumf>, %25, %cst_22 [0] : vector<256x256xf32> to vector<256xf32>
    %27 = vector.shape_cast %26 : vector<256xf32> to vector<1x256xf32>
    %28 = vector.broadcast %27 : vector<1x256xf32> to vector<256x256xf32>
    %29 = arith.subf %25, %28 : vector<256x256xf32>
    %30 = math.exp %29 : vector<256x256xf32>
    %cst_23 = arith.constant dense<0.000000e+00> : vector<256xf32>
    %31 = vector.multi_reduction <add>, %30, %cst_23 [0] : vector<256x256xf32> to vector<256xf32>
    %32 = vector.shape_cast %31 : vector<256xf32> to vector<1x256xf32>
    %cst_24 = arith.constant dense<0.000000e+00> : vector<8x256xf32>
    %33 = tpu.matmul %22, %30, %cst_24 {dimension_numbers = #tpu.dot_dimension_numbers<[1], [0], [0], [1], [0, 0, 1, 1], [], []>} : vector<8x256xf32>, vector<256x256xf32>, vector<8x256xf32> -> vector<8x256xf32>
    %34 = tpu.reciprocal %32 {approx = true} : vector<1x256xf32> -> vector<1x256xf32>
    %35 = vector.broadcast %34 : vector<1x256xf32> to vector<8x256xf32>
    %36 = arith.mulf %33, %35 : vector<8x256xf32>
    %37 = vector.extract_strided_slice %10 {offsets = [8, 0], sizes = [8, 256], strides = [1, 1]} : vector<16x256xf32> to vector<8x256xf32>
    %38 = vector.extract_strided_slice %18 {offsets = [8, 0], sizes = [8, 256], strides = [1, 1]} : vector<16x256xf32> to vector<8x256xf32>
    %39 = vector.extract_strided_slice %19 {offsets = [8, 0], sizes = [8, 256], strides = [1, 1]} : vector<16x256xf32> to vector<8x256xf32>
    %cst_25 = arith.constant dense<0.000000e+00> : vector<256x256xf32>
    %40 = tpu.matmul %38, %37, %cst_25 {dimension_numbers = #tpu.dot_dimension_numbers<[0], [0], [1], [1], [0, 1, 1, 1], [], []>} : vector<8x256xf32>, vector<8x256xf32>, vector<256x256xf32> -> vector<256x256xf32>
    %cst_26 = arith.constant 0.353553385 : f32
    %41 = vector.broadcast %cst_26 : f32 to vector<256x256xf32>
    %42 = arith.mulf %40, %41 : vector<256x256xf32>
    %cst_27 = arith.constant dense<0xFF800000> : vector<256xf32>
    %43 = vector.multi_reduction <maximumf>, %42, %cst_27 [0] : vector<256x256xf32> to vector<256xf32>
    %44 = vector.shape_cast %43 : vector<256xf32> to vector<1x256xf32>
    %45 = vector.broadcast %44 : vector<1x256xf32> to vector<256x256xf32>
    %46 = arith.subf %42, %45 : vector<256x256xf32>
    %47 = math.exp %46 : vector<256x256xf32>
    %cst_28 = arith.constant dense<0.000000e+00> : vector<256xf32>
    %48 = vector.multi_reduction <add>, %47, %cst_28 [0] : vector<256x256xf32> to vector<256xf32>
    %49 = vector.shape_cast %48 : vector<256xf32> to vector<1x256xf32>
    %cst_29 = arith.constant dense<0.000000e+00> : vector<8x256xf32>
    %50 = tpu.matmul %39, %47, %cst_29 {dimension_numbers = #tpu.dot_dimension_numbers<[1], [0], [0], [1], [0, 0, 1, 1], [], []>} : vector<8x256xf32>, vector<256x256xf32>, vector<8x256xf32> -> vector<8x256xf32>
    %51 = tpu.reciprocal %49 {approx = true} : vector<1x256xf32> -> vector<1x256xf32>
    %52 = vector.broadcast %51 : vector<1x256xf32> to vector<8x256xf32>
    %53 = arith.mulf %50, %52 : vector<8x256xf32>
    %54 = tpu.concatenate %36, %53 in 0 : vector<8x256xf32>, vector<8x256xf32> -> vector<16x256xf32>
    %c0_30 = arith.constant 0 : index
    %c0_31 = arith.constant 0 : index
    %c0_32 = arith.constant 0 : index
    %55 = vector.load %arg8[%c0_30, %c0_31, %c0_32] : memref<1x4x16xf32, #tpu.memory_space<vmem>>, vector<1x4x16xf32>
    %56 = vector.shape_cast %55 : vector<1x4x16xf32> to vector<4x16xf32>
    %cst_33 = arith.constant dense<0.000000e+00> : vector<4x256xf32>
    %57 = tpu.matmul %56, %54, %cst_33 {dimension_numbers = #tpu.dot_dimension_numbers<[1], [0], [0], [1], [0, 0, 1, 1], [], []>} : vector<4x16xf32>, vector<16x256xf32>, vector<4x256xf32> -> vector<4x256xf32>
    %c0_34 = arith.constant 0 : index
    %c0_35 = arith.constant 0 : index
    %c0_36 = arith.constant 0 : index
    %58 = vector.load %arg9[%c0_34, %c0_35, %c0_36] : memref<1x4x1xf32, #tpu.memory_space<vmem>>, vector<1x4x1xf32>
    %59 = vector.shape_cast %58 : vector<1x4x1xf32> to vector<4x1xf32>
    %60 = vector.broadcast %59 : vector<4x1xf32> to vector<4x256xf32>
    %61 = arith.addf %57, %60 : vector<4x256xf32>
    %62 = arith.addf %61, %1 : vector<4x256xf32>
    %c0_37 = arith.constant 0 : index
    %c0_38 = arith.constant 0 : index
    %c0_39 = arith.constant 0 : index
    %c0_40 = arith.constant 0 : index
    %63 = vector.load %arg10[%c0_37, %c0_38, %c0_39, %c0_40] : memref<1x1x4x256xf32, #tpu.memory_space<vmem>>, vector<1x1x4x256xf32>
    %64 = vector.shape_cast %63 : vector<1x1x4x256xf32> to vector<4x256xf32>
    %65 = vector.shape_cast %62 : vector<4x256xf32> to vector<1x1x4x256xf32>
    tpu.vector_store %arg10[%c0_37, %c0_38, %c0_39, %c0_40], %65 {strides = array<i32>} : memref<1x1x4x256xf32, #tpu.memory_space<vmem>>, vector<1x1x4x256xf32>,
    return
  }
  func.func @transform_0(%arg0: i32, %arg1: i32) -> (i32, i32, i32, i32) {
    %c0_i32 = arith.constant 0 : i32
    %c0_i32_0 = arith.constant 0 : i32
    %c0_i32_1 = arith.constant 0 : i32
    return %arg0, %arg1, %c0_i32, %c0_i32_0 : i32, i32, i32, i32
  }
  func.func @transform_1(%arg0: i32, %arg1: i32) -> (i32, i32, i32, i32) {
    %c0_i32 = arith.constant 0 : i32
    %c0_i32_0 = arith.constant 0 : i32
    %c0_i32_1 = arith.constant 0 : i32
    return %arg0, %arg1, %c0_i32, %c0_i32_0 : i32, i32, i32, i32
  }
  func.func @transform_2(%arg0: i32, %arg1: i32) -> (i32, i32, i32) {
    %c0_i32 = arith.constant 0 : i32
    %c0_i32_0 = arith.constant 0 : i32
    %c0_i32_1 = arith.constant 0 : i32
    return %arg0, %c0_i32, %c0_i32_0 : i32, i32, i32
  }
  func.func @transform_3(%arg0: i32, %arg1: i32) -> (i32, i32, i32) {
    %c0_i32 = arith.constant 0 : i32
    %c0_i32_0 = arith.constant 0 : i32
    %c0_i32_1 = arith.constant 0 : i32
    return %arg0, %c0_i32, %c0_i32_0 : i32, i32, i32
  }
  func.func @transform_4(%arg0: i32, %arg1: i32) -> (i32, i32, i32) {
    %c0_i32 = arith.constant 0 : i32
    %c0_i32_0 = arith.constant 0 : i32
    %c0_i32_1 = arith.constant 0 : i32
    return %arg0, %c0_i32, %c0_i32_0 : i32, i32, i32
  }
  func.func @transform_5(%arg0: i32, %arg1: i32) -> (i32, i32, i32) {
    %c0_i32 = arith.constant 0 : i32
    %c0_i32_0 = arith.constant 0 : i32
    %c0_i32_1 = arith.constant 0 : i32
    return %arg0, %c0_i32, %c0_i32_0 : i32, i32, i32
  }
  func.func @transform_6(%arg0: i32, %arg1: i32) -> (i32, i32, i32) {
    %c0_i32 = arith.constant 0 : i32
    %c0_i32_0 = arith.constant 0 : i32
    %c0_i32_1 = arith.constant 0 : i32
    return %arg0, %c0_i32, %c0_i32_0 : i32, i32, i32
  }
  func.func @transform_7(%arg0: i32, %arg1: i32) -> (i32, i32, i32) {
    %c0_i32 = arith.constant 0 : i32
    %c0_i32_0 = arith.constant 0 : i32
    %c0_i32_1 = arith.constant 0 : i32
    return %arg0, %c0_i32, %c0_i32_0 : i32, i32, i32
  }
  func.func @transform_8(%arg0: i32, %arg1: i32) -> (i32, i32, i32, i32) {
    %c0_i32 = arith.constant 0 : i32
    %c0_i32_0 = arith.constant 0 : i32
    %c0_i32_1 = arith.constant 0 : i32
    return %arg0, %arg1, %c0_i32, %c0_i32_0 : i32, i32, i32, i32
  }
}

</mosaic_0001>

<llo_original>
// kernel: tpu_custom_call.1
$region0: #{tpu_custom_call.1}
  #allocation0 [shape = 'u32[]', space=smem, size = 0x4, offset = 0x4, fixed_abs, tag = 'smem constant byte address 0x4 - core index']
  #allocation1 [shape = 'u32[72,128]{1,0:T(1,128)}', space=vmem, size = 0x9000, scoped, tag = 'internal scratch']
  %s0 = inlined_call_operand.vmem [shape: f32[2,2,4,256], index: 0, kind: input, shape index: {}]
  %s1 = inlined_call_operand.vmem [shape: f32[2,2,4,256], index: 1, kind: input, shape index: {}]
  %s2 = inlined_call_operand.vmem [shape: f32[2,16,4], index: 2, kind: input, shape index: {}]
  %s3 = inlined_call_operand.vmem [shape: f32[2,16,1], index: 3, kind: input, shape index: {}]
  %s4 = inlined_call_operand.vmem [shape: f32[2,32,4], index: 4, kind: input, shape index: {}]
  %s5 = inlined_call_operand.vmem [shape: f32[2,32,1], index: 5, kind: input, shape index: {}]
  %s6 = inlined_call_operand.vmem [shape: f32[2,4,16], index: 6, kind: input, shape index: {}]
  %s7 = inlined_call_operand.vmem [shape: f32[2,4,1], index: 7, kind: input, shape index: {}]
  %s8 = inlined_call_operand.hbm [shape: f32[2,2,4,256], index: 8, kind: output, shape index: {}]
  %s9 = sld [smem:[#allocation0]]
  $region65: #{tpu_custom_call.1} parent=0
    _
  %s11 = ssub.s32 1, %s9
  %s12 = scalar_select 0, %s11, %s9
  $region1: #{tpu_custom_call.1} parent=0
    #allocation2 [shape = 'u8[8192]{0}', space=vmem, size = 0x2000, scoped, tag = 'output window, operand 0']
    #allocation3 [shape = 's32[2]{0}', space=sflag, size = 0x8, scoped, tag = 'scoped memory for tpu_custom_call.1']
    %13 = vsyncpa [#allocation3], 0
    %s14 = scalar_lea.sflag [#allocation3], 1
    %15 = vsyncpa %s14, 0
    loop: start=0, step=1, limit=6
    $region2: #{tpu_custom_call.1} parent=1 // loop_pre_header
      _
    $region3: #{tpu_custom_call.1} parent=1 // loop_header
      %s17 = sphi 0, %s21
      %p18 = scmp.ge.s32.totalorder %s17, 6
      %s24 = sphi 0, %s36
      %s25 = sphi 0, %s32
      %s26 = sphi 0, %s24
      %s27 = sphi 0, %s25
      %s28 = sphi 0, %s26
      %s29 = sphi 0, %s27
      %s41 = sphi 0, %s43
      %s44 = sphi 0, %s41
      %s45 = sphi 0, %s44
      %s61 = sphi 0, %s45
      %s69 = sphi 0, %s71
      %s72 = sphi 0, %s69
      %s73 = sphi 0, %s72
      %s89 = sphi 0, %s73
      %s95 = sphi 0, %s97
      %s98 = sphi 0, %s95
      %s99 = sphi 0, %s98
      %s115 = sphi 0, %s99
      %s121 = sphi 0, %s123
      %s124 = sphi 0, %s121
      %s125 = sphi 0, %s124
      %s141 = sphi 0, %s125
      %s147 = sphi 0, %s149
      %s150 = sphi 0, %s147
      %s151 = sphi 0, %s150
      %s167 = sphi 0, %s151
      %s173 = sphi 0, %s175
      %s176 = sphi 0, %s173
      %s177 = sphi 0, %s176
      %s193 = sphi 0, %s177
      %s199 = sphi 0, %s201
      %s202 = sphi 0, %s199
      %s203 = sphi 0, %s202
      %s219 = sphi 0, %s203
      %s225 = sphi 0, %s227
      %s228 = sphi 0, %s225
      %s229 = sphi 0, %s228
      %s245 = sphi 0, %s229
      %s253 = sphi 0, %s255
      %s256 = sphi 0, %s253
      %s257 = sphi 0, %s256
      %s273 = sphi 0, %s257
    $region4: #{tpu_custom_call.1} parent=1 // loop_header_branch
      %20 = sbr.rel (%p18) target = $region8
    $region5: #{tpu_custom_call.1} parent=1 // loop_body
      %s22 = ssub.s32 %s17, 1
      %s23 = ssub.s32 %s17, 2
      %s30 = sadd.s32 1, %s25
      %p31 = scmp.ge.s32.totalorder %s30, 2
      %s32 = scalar_select %p31, 0, %s30
      %s33 = sadd.s32 1, %s24
      %s34 = scalar_select %p31, %s33, %s24
      %p35 = scmp.ge.s32.totalorder %s34, 2
      %s36 = scalar_select %p35, 0, %s34
      %s37 = ssub.s32 %s24, %s36
      %s38 = ssub.s32 %s25, %s32
      %s39 = sor.u32 %s37, %s38
      %p40 = scmp.eq.s32.totalorder %s39, 0
      %s42 = sadd.s32 %s41, 1
      %s43 = scalar_select %p40, %s41, %s42
      %p46 = pneg %p40
      %p47 = scmp.eq.s32.totalorder %s17, 3
      %p48 = por %p46, %p47
      %p49 = scmp.ne.s32.totalorder %s41, %s44
      %p50 = scmp.eq.s32.totalorder %s17, 0
      %p51 = por %p49, %p50
      %p52 = scmp.ne.s32.totalorder %s41, %s44
      %p53 = scmp.eq.s32.totalorder %s22, 3
      %p54 = por %p52, %p53
      %p55 = scmp.ne.s32.totalorder %s44, %s45
      %p56 = scmp.eq.s32.totalorder %s22, 0
      %p57 = por %p55, %p56
      %p58 = scmp.ne.s32.totalorder %s44, %s45
      %p59 = scmp.eq.s32.totalorder %s23, 3
      %p60 = por %p58, %p59
      %p62 = scmp.ne.s32.totalorder %s45, %s61
      %p63 = scmp.eq.s32.totalorder %s23, 0
      %p64 = por %p62, %p63
      %s65 = ssub.s32 %s24, %s36
      %s66 = ssub.s32 %s25, %s32
      %s67 = sor.u32 %s65, %s66
      %p68 = scmp.eq.s32.totalorder %s67, 0
      %s70 = sadd.s32 %s69, 1
      %s71 = scalar_select %p68, %s69, %s70
      %p74 = pneg %p68
      %p75 = scmp.eq.s32.totalorder %s17, 3
      %p76 = por %p74, %p75
      %p77 = scmp.ne.s32.totalorder %s69, %s72
      %p78 = scmp.eq.s32.totalorder %s17, 0
      %p79 = por %p77, %p78
      %p80 = scmp.ne.s32.totalorder %s69, %s72
      %p81 = scmp.eq.s32.totalorder %s22, 3
      %p82 = por %p80, %p81
      %p83 = scmp.ne.s32.totalorder %s72, %s73
      %p84 = scmp.eq.s32.totalorder %s22, 0
      %p85 = por %p83, %p84
      %p86 = scmp.ne.s32.totalorder %s72, %s73
      %p87 = scmp.eq.s32.totalorder %s23, 3
      %p88 = por %p86, %p87
      %p90 = scmp.ne.s32.totalorder %s73, %s89
      %p91 = scmp.eq.s32.totalorder %s23, 0
      %p92 = por %p90, %p91
      %s93 = ssub.s32 %s24, %s36
      %p94 = scmp.eq.s32.totalorder %s93, 0
      %s96 = sadd.s32 %s95, 1
      %s97 = scalar_select %p94, %s95, %s96
      %p100 = pneg %p94
      %p101 = scmp.eq.s32.totalorder %s17, 3
      %p102 = por %p100, %p101
      %p103 = scmp.ne.s32.totalorder %s95, %s98
      %p104 = scmp.eq.s32.totalorder %s17, 0
      %p105 = por %p103, %p104
      %p106 = scmp.ne.s32.totalorder %s95, %s98
      %p107 = scmp.eq.s32.totalorder %s22, 3
      %p108 = por %p106, %p107
      %p109 = scmp.ne.s32.totalorder %s98, %s99
      %p110 = scmp.eq.s32.totalorder %s22, 0
      %p111 = por %p109, %p110
      %p112 = scmp.ne.s32.totalorder %s98, %s99
      %p113 = scmp.eq.s32.totalorder %s23, 3
      %p114 = por %p112, %p113
      %p116 = scmp.ne.s32.totalorder %s99, %s115
      %p117 = scmp.eq.s32.totalorder %s23, 0
      %p118 = por %p116, %p117
      %s119 = ssub.s32 %s24, %s36
      %p120 = scmp.eq.s32.totalorder %s119, 0
      %s122 = sadd.s32 %s121, 1
      %s123 = scalar_select %p120, %s121, %s122
      %p126 = pneg %p120
      %p127 = scmp.eq.s32.totalorder %s17, 3
      %p128 = por %p126, %p127
      %p129 = scmp.ne.s32.totalorder %s121, %s124
      %p130 = scmp.eq.s32.totalorder %s17, 0
      %p131 = por %p129, %p130
      %p132 = scmp.ne.s32.totalorder %s121, %s124
      %p133 = scmp.eq.s32.totalorder %s22, 3
      %p134 = por %p132, %p133
      %p135 = scmp.ne.s32.totalorder %s124, %s125
      %p136 = scmp.eq.s32.totalorder %s22, 0
      %p137 = por %p135, %p136
      %p138 = scmp.ne.s32.totalorder %s124, %s125
      %p139 = scmp.eq.s32.totalorder %s23, 3
      %p140 = por %p138, %p139
      %p142 = scmp.ne.s32.totalorder %s125, %s141
      %p143 = scmp.eq.s32.totalorder %s23, 0
      %p144 = por %p142, %p143
      %s145 = ssub.s32 %s24, %s36
      %p146 = scmp.eq.s32.totalorder %s145, 0
      %s148 = sadd.s32 %s147, 1
      %s149 = scalar_select %p146, %s147, %s148
      %p152 = pneg %p146
      %p153 = scmp.eq.s32.totalorder %s17, 3
      %p154 = por %p152, %p153
      %p155 = scmp.ne.s32.totalorder %s147, %s150
      %p156 = scmp.eq.s32.totalorder %s17, 0
      %p157 = por %p155, %p156
      %p158 = scmp.ne.s32.totalorder %s147, %s150
      %p159 = scmp.eq.s32.totalorder %s22, 3
      %p160 = por %p158, %p159
      %p161 = scmp.ne.s32.totalorder %s150, %s151
      %p162 = scmp.eq.s32.totalorder %s22, 0
      %p163 = por %p161, %p162
      %p164 = scmp.ne.s32.totalorder %s150, %s151
      %p165 = scmp.eq.s32.totalorder %s23, 3
      %p166 = por %p164, %p165
      %p168 = scmp.ne.s32.totalorder %s151, %s167
      %p169 = scmp.eq.s32.totalorder %s23, 0
      %p170 = por %p168, %p169
      %s171 = ssub.s32 %s24, %s36
      %p172 = scmp.eq.s32.totalorder %s171, 0
      %s174 = sadd.s32 %s173, 1
      %s175 = scalar_select %p172, %s173, %s174
      %p178 = pneg %p172
      %p179 = scmp.eq.s32.totalorder %s17, 3
      %p180 = por %p178, %p179
      %p181 = scmp.ne.s32.totalorder %s173, %s176
      %p182 = scmp.eq.s32.totalorder %s17, 0
      %p183 = por %p181, %p182
      %p184 = scmp.ne.s32.totalorder %s173, %s176
      %p185 = scmp.eq.s32.totalorder %s22, 3
      %p186 = por %p184, %p185
      %p187 = scmp.ne.s32.totalorder %s176, %s177
      %p188 = scmp.eq.s32.totalorder %s22, 0
      %p189 = por %p187, %p188
      %p190 = scmp.ne.s32.totalorder %s176, %s177
      %p191 = scmp.eq.s32.totalorder %s23, 3
      %p192 = por %p190, %p191
      %p194 = scmp.ne.s32.totalorder %s177, %s193
      %p195 = scmp.eq.s32.totalorder %s23, 0
      %p196 = por %p194, %p195
      %s197 = ssub.s32 %s24, %s36
      %p198 = scmp.eq.s32.totalorder %s197, 0
      %s200 = sadd.s32 %s199, 1
      %s201 = scalar_select %p198, %s199, %s200
      %p204 = pneg %p198
      %p205 = scmp.eq.s32.totalorder %s17, 3
      %p206 = por %p204, %p205
      %p207 = scmp.ne.s32.totalorder %s199, %s202
      %p208 = scmp.eq.s32.totalorder %s17, 0
      %p209 = por %p207, %p208
      %p210 = scmp.ne.s32.totalorder %s199, %s202
      %p211 = scmp.eq.s32.totalorder %s22, 3
      %p212 = por %p210, %p211
      %p213 = scmp.ne.s32.totalorder %s202, %s203
      %p214 = scmp.eq.s32.totalorder %s22, 0
      %p215 = por %p213, %p214
      %p216 = scmp.ne.s32.totalorder %s202, %s203
      %p217 = scmp.eq.s32.totalorder %s23, 3
      %p218 = por %p216, %p217
      %p220 = scmp.ne.s32.totalorder %s203, %s219
      %p221 = scmp.eq.s32.totalorder %s23, 0
      %p222 = por %p220, %p221
      %s223 = ssub.s32 %s24, %s36
      %p224 = scmp.eq.s32.totalorder %s223, 0
      %s226 = sadd.s32 %s225, 1
      %s227 = scalar_select %p224, %s225, %s226
      %p230 = pneg %p224
      %p231 = scmp.eq.s32.totalorder %s17, 3
      %p232 = por %p230, %p231
      %p233 = scmp.ne.s32.totalorder %s225, %s228
      %p234 = scmp.eq.s32.totalorder %s17, 0
      %p235 = por %p233, %p234
      %p236 = scmp.ne.s32.totalorder %s225, %s228
      %p237 = scmp.eq.s32.totalorder %s22, 3
      %p238 = por %p236, %p237
      %p239 = scmp.ne.s32.totalorder %s228, %s229
      %p240 = scmp.eq.s32.totalorder %s22, 0
      %p241 = por %p239, %p240
      %p242 = scmp.ne.s32.totalorder %s228, %s229
      %p243 = scmp.eq.s32.totalorder %s23, 3
      %p244 = por %p242, %p243
      %p246 = scmp.ne.s32.totalorder %s229, %s245
      %p247 = scmp.eq.s32.totalorder %s23, 0
      %p248 = por %p246, %p247
      %s249 = ssub.s32 %s24, %s36
      %s250 = ssub.s32 %s25, %s32
      %s251 = sor.u32 %s249, %s250
      %p252 = scmp.eq.s32.totalorder %s251, 0
      %s254 = sadd.s32 %s253, 1
      %s255 = scalar_select %p252, %s253, %s254
      %p258 = pneg %p252
      %p259 = scmp.eq.s32.totalorder %s17, 3
      %p260 = por %p258, %p259
      %p261 = scmp.ne.s32.totalorder %s253, %s256
      %p262 = scmp.eq.s32.totalorder %s17, 0
      %p263 = por %p261, %p262
      %p264 = scmp.ne.s32.totalorder %s253, %s256
      %p265 = scmp.eq.s32.totalorder %s22, 3
      %p266 = por %p264, %p265
      %p267 = scmp.ne.s32.totalorder %s256, %s257
      %p268 = scmp.eq.s32.totalorder %s22, 0
      %p269 = por %p267, %p268
      %p270 = scmp.ne.s32.totalorder %s256, %s257
      %p271 = scmp.eq.s32.totalorder %s23, 3
      %p272 = por %p270, %p271
      %p274 = scmp.ne.s32.totalorder %s257, %s273
      %p275 = scmp.eq.s32.totalorder %s23, 0
      %p276 = por %p274, %p275
      %p277 = scmp.le.s32.totalorder 1, %s17
      %p278 = scmp.lt.s32.totalorder %s17, 5
      %p279 = pnand %p277, %p278
      %p280 = pneg %p279
      // Predicated region
      $region9: #{tpu_custom_call.1} parent=5 // pred_check
        _
      $region10: #{tpu_custom_call.1} parent=5 // pred_check_branch
        %282 = sbr.rel (%p279) target = $region12
      $region11: #{tpu_custom_call.1} parent=5 // pred_region
        %s283 = ssub.s32 %s17, 1
      $region12: #{tpu_custom_call.1} parent=5 // pred_fallthru
        _
      %p284 = scmp.lt.s32.totalorder %s17, 4
      // Predicated region
      $region13: #{tpu_custom_call.1} parent=5 // pred_check
        %p285 = pneg %p284
      $region14: #{tpu_custom_call.1} parent=5 // pred_check_branch
        %287 = sbr.rel (%p285) target = $region16
      $region15: #{tpu_custom_call.1} parent=5 // pred_region
        // Predicated region
        $region17: #{tpu_custom_call.1} parent=15 // pred_check
          %p288 = pneg %p51
        $region18: #{tpu_custom_call.1} parent=15 // pred_check_branch
          %290 = sbr.rel (%p288) target = $region20
        $region19: #{tpu_custom_call.1} parent=15 // pred_region
          %p291 = scmp.lt.s32.totalorder %s24, 1
          %s292 = scalar_select %p291, %s24, 1
          %p293 = scmp.lt.s32.totalorder %s25, 1
          %s294 = scalar_select %p293, %s25, 1
          %s295 = smul.addr %s294, 2
          %s296 = smul.addr %s292, 4
          %s297 = sadd.s32 %s295, %s296
          %s298 = smul.addr %s297, 4
          %s299 = scalar_lea.vmem %s0, %s298
        $region20: #{tpu_custom_call.1} parent=15 // pred_fallthru
          _
        // Predicated region
        $region21: #{tpu_custom_call.1} parent=15 // pred_check
          %p300 = pneg %p79
        $region22: #{tpu_custom_call.1} parent=15 // pred_check_branch
          %302 = sbr.rel (%p300) target = $region24
        $region23: #{tpu_custom_call.1} parent=15 // pred_region
          %p303 = scmp.lt.s32.totalorder %s24, 1
          %s304 = scalar_select %p303, %s24, 1
          %p305 = scmp.lt.s32.totalorder %s25, 1
          %s306 = scalar_select %p305, %s25, 1
          %s307 = smul.addr %s306, 2
          %s308 = smul.addr %s304, 4
          %s309 = sadd.s32 %s307, %s308
          %s310 = smul.addr %s309, 4
          %s311 = scalar_lea.vmem %s1, %s310
        $region24: #{tpu_custom_call.1} parent=15 // pred_fallthru
          _
        // Predicated region
        $region25: #{tpu_custom_call.1} parent=15 // pred_check
          %p312 = pneg %p105
        $region26: #{tpu_custom_call.1} parent=15 // pred_check_branch
          %314 = sbr.rel (%p312) target = $region28
        $region27: #{tpu_custom_call.1} parent=15 // pred_region
          %p315 = scmp.lt.s32.totalorder %s24, 1
          %s316 = scalar_select %p315, %s24, 1
          %s317 = smul.addr %s316, 2
          %s318 = smul.addr %s317, 8
          %s319 = scalar_lea.vmem %s2, %s318
        $region28: #{tpu_custom_call.1} parent=15 // pred_fallthru
          _
        // Predicated region
        $region29: #{tpu_custom_call.1} parent=15 // pred_check
          %p320 = pneg %p131
        $region30: #{tpu_custom_call.1} parent=15 // pred_check_branch
          %322 = sbr.rel (%p320) target = $region32
        $region31: #{tpu_custom_call.1} parent=15 // pred_region
          %p323 = scmp.lt.s32.totalorder %s24, 1
          %s324 = scalar_select %p323, %s24, 1
          %s325 = smul.addr %s324, 2
          %s326 = smul.addr %s325, 8
          %s327 = scalar_lea.vmem %s3, %s326
        $region32: #{tpu_custom_call.1} parent=15 // pred_fallthru
          _
        // Predicated region
        $region33: #{tpu_custom_call.1} parent=15 // pred_check
          %p328 = pneg %p157
        $region34: #{tpu_custom_call.1} parent=15 // pred_check_branch
          %330 = sbr.rel (%p328) target = $region36
        $region35: #{tpu_custom_call.1} parent=15 // pred_region
          %p331 = scmp.lt.s32.totalorder %s24, 1
          %s332 = scalar_select %p331, %s24, 1
          %s333 = smul.addr %s332, 4
          %s334 = smul.addr %s333, 8
          %s335 = scalar_lea.vmem %s4, %s334
        $region36: #{tpu_custom_call.1} parent=15 // pred_fallthru
          _
        // Predicated region
        $region37: #{tpu_custom_call.1} parent=15 // pred_check
          %p336 = pneg %p183
        $region38: #{tpu_custom_call.1} parent=15 // pred_check_branch
          %338 = sbr.rel (%p336) target = $region40
        $region39: #{tpu_custom_call.1} parent=15 // pred_region
          %p339 = scmp.lt.s32.totalorder %s24, 1
          %s340 = scalar_select %p339, %s24, 1
          %s341 = smul.addr %s340, 4
          %s342 = smul.addr %s341, 8
          %s343 = scalar_lea.vmem %s5, %s342
        $region40: #{tpu_custom_call.1} parent=15 // pred_fallthru
          _
        // Predicated region
        $region41: #{tpu_custom_call.1} parent=15 // pred_check
          %p344 = pneg %p209
        $region42: #{tpu_custom_call.1} parent=15 // pred_check_branch
          %346 = sbr.rel (%p344) target = $region44
        $region43: #{tpu_custom_call.1} parent=15 // pred_region
          %p347 = scmp.lt.s32.totalorder %s24, 1
          %s348 = scalar_select %p347, %s24, 1
          %s349 = smul.addr %s348, 4
          %s350 = scalar_lea.vmem %s6, %s349
        $region44: #{tpu_custom_call.1} parent=15 // pred_fallthru
          _
        // Predicated region
        $region45: #{tpu_custom_call.1} parent=15 // pred_check
          %p351 = pneg %p235
        $region46: #{tpu_custom_call.1} parent=15 // pred_check_branch
          %353 = sbr.rel (%p351) target = $region48
        $region47: #{tpu_custom_call.1} parent=15 // pred_region
          %p354 = scmp.lt.s32.totalorder %s24, 1
          %s355 = scalar_select %p354, %s24, 1
          %s356 = smul.addr %s355, 4
          %s357 = scalar_lea.vmem %s7, %s356
        $region48: #{tpu_custom_call.1} parent=15 // pred_fallthru
          _
      $region16: #{tpu_custom_call.1} parent=5 // pred_fallthru
        _
      %p358 = scmp.le.s32.totalorder 1, %s17
      %p359 = scmp.lt.s32.totalorder %s17, 5
      %p360 = pnand %p358, %p359
      %p361 = pneg %p360
      // Predicated region
      $region49: #{tpu_custom_call.1} parent=5 // pred_check
        _
      $region50: #{tpu_custom_call.1} parent=5 // pred_check_branch
        %363 = sbr.rel (%p360) target = $region52
      $region51: #{tpu_custom_call.1} parent=5 // pred_region
        %s364 = ssub.s32 %s17, 1
        %p365 = scmp.lt.s32.totalorder %s26, 1
        %s366 = scalar_select %p365, %s26, 1
        %p367 = scmp.lt.s32.totalorder %s27, 1
        %s368 = scalar_select %p367, %s27, 1
        %s369 = smul.addr %s368, 2
        %s370 = smul.addr %s366, 4
        %s371 = sadd.s32 %s369, %s370
        %s372 = smul.addr %s371, 4
        %s373 = scalar_lea.vmem %s0, %s372
        %p374 = pneg %p57
        %p375 = pneg %p54
        %p376 = scmp.lt.s32.totalorder %s26, 1
        %s377 = scalar_select %p376, %s26, 1
        %p378 = scmp.lt.s32.totalorder %s27, 1
        %s379 = scalar_select %p378, %s27, 1
        %s380 = smul.addr %s379, 2
        %s381 = smul.addr %s377, 4
        %s382 = sadd.s32 %s380, %s381
        %s383 = smul.addr %s382, 4
        %s384 = scalar_lea.vmem %s1, %s383
        %p385 = pneg %p85
        %p386 = pneg %p82
        %p387 = scmp.lt.s32.totalorder %s26, 1
        %s388 = scalar_select %p387, %s26, 1
        %s389 = smul.addr %s388, 2
        %s390 = smul.addr %s389, 8
        %s391 = scalar_lea.vmem %s2, %s390
        %p392 = pneg %p111
        %p393 = pneg %p108
        %p394 = scmp.lt.s32.totalorder %s26, 1
        %s395 = scalar_select %p394, %s26, 1
        %s396 = smul.addr %s395, 2
        %s397 = smul.addr %s396, 8
        %s398 = scalar_lea.vmem %s3, %s397
        %p399 = pneg %p137
        %p400 = pneg %p134
        %p401 = scmp.lt.s32.totalorder %s26, 1
        %s402 = scalar_select %p401, %s26, 1
        %s403 = smul.addr %s402, 4
        %s404 = smul.addr %s403, 8
        %s405 = scalar_lea.vmem %s4, %s404
        %p406 = pneg %p163
        %p407 = pneg %p160
        %p408 = scmp.lt.s32.totalorder %s26, 1
        %s409 = scalar_select %p408, %s26, 1
        %s410 = smul.addr %s409, 4
        %s411 = smul.addr %s410, 8
        %s412 = scalar_lea.vmem %s5, %s411
        %p413 = pneg %p189
        %p414 = pneg %p186
        %p415 = scmp.lt.s32.totalorder %s26, 1
        %s416 = scalar_select %p415, %s26, 1
        %s417 = smul.addr %s416, 4
        %s418 = scalar_lea.vmem %s6, %s417
        %p419 = pneg %p215
        %p420 = pneg %p212
        %p421 = scmp.lt.s32.totalorder %s26, 1
        %s422 = scalar_select %p421, %s26, 1
        %s423 = smul.addr %s422, 4
        %s424 = scalar_lea.vmem %s7, %s423
        %p425 = pneg %p241
        %p426 = pneg %p238
        %p427 = pneg %p269
        %p428 = pneg %p266
        %s429 = sand.u32 %s256, 1
        %s430 = scalar_lea.sflag [#allocation3], %s429
        %s431 = sand.u32 %s256, 1
        %s432 = smul.addr %s431, 8
        %s433 = scalar_lea.vmem [#allocation2], %s432
        %p434 = scmp.lt.s32.totalorder %s26, 1
        %s435 = scalar_select %p434, %s26, 1
        %p436 = scmp.lt.s32.totalorder %s27, 1
        %s437 = scalar_select %p436, %s27, 1
        %s438 = smul.addr %s437, 2
        %s439 = smul.addr %s435, 4
        %s440 = sadd.s32 %s438, %s439
        %s441 = smul.addr %s440, 4
        %s442 = scalar_lea.vmem %s0, %s441
        %p443 = scmp.lt.s32.totalorder %s26, 1
        %s444 = scalar_select %p443, %s26, 1
        %p445 = scmp.lt.s32.totalorder %s27, 1
        %s446 = scalar_select %p445, %s27, 1
        %s447 = smul.addr %s446, 2
        %s448 = smul.addr %s444, 4
        %s449 = sadd.s32 %s447, %s448
        %s450 = smul.addr %s449, 4
        %s451 = scalar_lea.vmem %s1, %s450
        %p452 = scmp.lt.s32.totalorder %s26, 1
        %s453 = scalar_select %p452, %s26, 1
        %s454 = smul.addr %s453, 2
        %s455 = smul.addr %s454, 8
        %s456 = scalar_lea.vmem %s2, %s455
        %p457 = scmp.lt.s32.totalorder %s26, 1
        %s458 = scalar_select %p457, %s26, 1
        %s459 = smul.addr %s458, 2
        %s460 = smul.addr %s459, 8
        %s461 = scalar_lea.vmem %s3, %s460
        %p462 = scmp.lt.s32.totalorder %s26, 1
        %s463 = scalar_select %p462, %s26, 1
        %s464 = smul.addr %s463, 4
        %s465 = smul.addr %s464, 8
        %s466 = scalar_lea.vmem %s4, %s465
        %p467 = scmp.lt.s32.totalorder %s26, 1
        %s468 = scalar_select %p467, %s26, 1
        %s469 = smul.addr %s468, 4
        %s470 = smul.addr %s469, 8
        %s471 = scalar_lea.vmem %s5, %s470
        %p472 = scmp.lt.s32.totalorder %s26, 1
        %s473 = scalar_select %p472, %s26, 1
        %s474 = smul.addr %s473, 4
        %s475 = scalar_lea.vmem %s6, %s474
        %p476 = scmp.lt.s32.totalorder %s26, 1
        %s477 = scalar_select %p476, %s26, 1
        %s478 = smul.addr %s477, 4
        %s479 = scalar_lea.vmem %s7, %s478
        %v480 = vld [vmem:[%s442] sm:$0xff]
        %v481 = vld [vmem:[%s451] sm:$0xff]
        %v482 = vld [vmem:[%s456] sm:$0xff]
        %v483 = vld [vmem:[%s456 + $0x8] sm:$0xff]
        %v484 = vld [vmem:[%s461] sm:$0xff]
        %v485 = vld [vmem:[%s461 + $0x8] sm:$0xff]
        %487 = vset.pattern.permute.xlu0 0
        %488 = vperm.xlu0 %487, %v484
        %v489 = vpop.permute.xlu0 %488
        %492 = vset.pattern.permute.xlu0 0
        %493 = vperm.xlu0 %492, %v485
        %v494 = vpop.permute.xlu0 %493
        %497 = vst [vmem:[#allocation1] ss:$2 sm:$0xff] %v481
        %v498 = vld.sshfl [vmem:[#allocation1] sm:$0xff pattern:$0x75316420]
        %v499 = vld.sshfl [vmem:[#allocation1 + $0x8] sm:$0xff pattern:$0x75316420]
        %vm500 = vcmask 31744
        %v502 = vsel %vm500, %v482, 0
        %v505 = vsel %vm500, %v483, 0
        %vm507 = vcmask 1043456
        %v508 = vsel %vm507, %v498, 0
        %v510 = vsel %vm507, %v499, 0
        %512 = vmatpush.msra.mxu0 0.0
        %513 = vmatpush.msra.mxu0 0.0
        %514 = vmatpush.msra.mxu0 0.0
        %515 = vmatpush.msra.mxu0 0.0
        %516 = vmatpush.msra.mxu0 0.0
        %517 = vmatpush.msra.mxu0 0.0
        %518 = vmatpush.msra.mxu0 0.0
        %519 = vmatpush.msra.mxu0 0.0
        %520 = vmatpush.msra.mxu0 0.0
        %521 = vmatpush.msra.mxu0 0.0
        %522 = vmatpush.msra.mxu0 0.0
        %523 = vmatpush.msra.mxu0 0.0
        %524 = vmatpush.msra.mxu0 0.0
        %525 = vmatpush.msra.mxu0 0.0
        %526 = vmatpush.msra.mxu0 0.0
        %527 = vmatpush.msra.mxu0 %v508
        %528 = vmatmul.f32.gmra.mxu0 %v502
        %v529 = vpop.f32.mrf.mxu0
        %v530 = vadd.f32 %v489, %v529
        %531 = vmatmul.f32.gmra.mxu0 %v505
        %v532 = vpop.f32.mrf.mxu0
        %v533 = vadd.f32 %v494, %v532
        %534 = vdwg.mxu0
        %535 = vmatpush.msra.mxu0 0.0
        %536 = vmatpush.msra.mxu0 0.0
        %537 = vmatpush.msra.mxu0 0.0
        %538 = vmatpush.msra.mxu0 0.0
        %539 = vmatpush.msra.mxu0 0.0
        %540 = vmatpush.msra.mxu0 0.0
        %541 = vmatpush.msra.mxu0 0.0
        %542 = vmatpush.msra.mxu0 0.0
        %543 = vmatpush.msra.mxu0 0.0
        %544 = vmatpush.msra.mxu0 0.0
        %545 = vmatpush.msra.mxu0 0.0
        %546 = vmatpush.msra.mxu0 0.0
        %547 = vmatpush.msra.mxu0 0.0
        %548 = vmatpush.msra.mxu0 0.0
        %549 = vmatpush.msra.mxu0 0.0
        %550 = vmatpush.msra.mxu0 %v510
        %551 = vmatmul.f32.gmra.mxu0 %v502
        %v552 = vpop.f32.mrf.mxu0
        %v553 = vadd.f32 %v489, %v552
        %554 = vmatmul.f32.gmra.mxu0 %v505
        %v555 = vpop.f32.mrf.mxu0
        %v556 = vadd.f32 %v494, %v555
        %557 = vdwg.mxu0
        %v558 = vld [vmem:[%s466] sm:$0xff]
        %v559 = vld [vmem:[%s466 + $0x8] sm:$0xff]
        %v560 = vld [vmem:[%s466 + $0x10] sm:$0xff]
        %v561 = vld [vmem:[%s466 + $0x18] sm:$0xff]
        %v562 = vld [vmem:[%s471] sm:$0xff]
        %v563 = vld [vmem:[%s471 + $0x8] sm:$0xff]
        %v564 = vld [vmem:[%s471 + $0x10] sm:$0xff]
        %v565 = vld [vmem:[%s471 + $0x18] sm:$0xff]
        %567 = vset.pattern.permute.xlu0 0
        %568 = vperm.xlu0 %567, %v562
        %v569 = vpop.permute.xlu0 %568
        %572 = vset.pattern.permute.xlu0 0
        %573 = vperm.xlu0 %572, %v563
        %v574 = vpop.permute.xlu0 %573
        %577 = vset.pattern.permute.xlu0 0
        %578 = vperm.xlu0 %577, %v564
        %v579 = vpop.permute.xlu0 %578
        %582 = vset.pattern.permute.xlu0 0
        %583 = vperm.xlu0 %582, %v565
        %v584 = vpop.permute.xlu0 %583
        %587 = vst [vmem:[#allocation1] ss:$2 sm:$0xff] %v480
        %v588 = vld.sshfl [vmem:[#allocation1] sm:$0xff pattern:$0x75316420]
        %v589 = vld.sshfl [vmem:[#allocation1 + $0x8] sm:$0xff pattern:$0x75316420]
        %v591 = vsel %vm500, %v558, 0
        %v594 = vsel %vm500, %v559, 0
        %v597 = vsel %vm500, %v560, 0
        %v600 = vsel %vm500, %v561, 0
        %v602 = vsel %vm507, %v588, 0
        %v604 = vsel %vm507, %v589, 0
        %606 = vmatpush.msra.mxu0 0.0
        %607 = vmatpush.msra.mxu0 0.0
        %608 = vmatpush.msra.mxu0 0.0
        %609 = vmatpush.msra.mxu0 0.0
        %610 = vmatpush.msra.mxu0 0.0
        %611 = vmatpush.msra.mxu0 0.0
        %612 = vmatpush.msra.mxu0 0.0
        %613 = vmatpush.msra.mxu0 0.0
        %614 = vmatpush.msra.mxu0 0.0
        %615 = vmatpush.msra.mxu0 0.0
        %616 = vmatpush.msra.mxu0 0.0
        %617 = vmatpush.msra.mxu0 0.0
        %618 = vmatpush.msra.mxu0 0.0
        %619 = vmatpush.msra.mxu0 0.0
        %620 = vmatpush.msra.mxu0 0.0
        %621 = vmatpush.msra.mxu0 %v602
        %622 = vmatmul.f32.gmra.mxu0 %v591
        %v623 = vpop.f32.mrf.mxu0
        %v624 = vadd.f32 %v569, %v623
        %625 = vmatmul.f32.gmra.mxu0 %v594
        %v626 = vpop.f32.mrf.mxu0
        %v627 = vadd.f32 %v574, %v626
        %628 = vmatmul.f32.gmra.mxu0 %v597
        %v629 = vpop.f32.mrf.mxu0
        %v630 = vadd.f32 %v579, %v629
        %631 = vmatmul.f32.gmra.mxu0 %v600
        %v632 = vpop.f32.mrf.mxu0
        %v633 = vadd.f32 %v584, %v632
        %634 = vdwg.mxu0
        %635 = vmatpush.msra.mxu0 0.0
        %636 = vmatpush.msra.mxu0 0.0
        %637 = vmatpush.msra.mxu0 0.0
        %638 = vmatpush.msra.mxu0 0.0
        %639 = vmatpush.msra.mxu0 0.0
        %640 = vmatpush.msra.mxu0 0.0
        %641 = vmatpush.msra.mxu0 0.0
        %642 = vmatpush.msra.mxu0 0.0
        %643 = vmatpush.msra.mxu0 0.0
        %644 = vmatpush.msra.mxu0 0.0
        %645 = vmatpush.msra.mxu0 0.0
        %646 = vmatpush.msra.mxu0 0.0
        %647 = vmatpush.msra.mxu0 0.0
        %648 = vmatpush.msra.mxu0 0.0
        %649 = vmatpush.msra.mxu0 0.0
        %650 = vmatpush.msra.mxu0 %v604
        %651 = vmatmul.f32.gmra.mxu0 %v591
        %v652 = vpop.f32.mrf.mxu0
        %v653 = vadd.f32 %v569, %v652
        %654 = vmatmul.f32.gmra.mxu0 %v594
        %v655 = vpop.f32.mrf.mxu0
        %v656 = vadd.f32 %v574, %v655
        %657 = vmatmul.f32.gmra.mxu0 %v597
        %v658 = vpop.f32.mrf.mxu0
        %v659 = vadd.f32 %v579, %v658
        %660 = vmatmul.f32.gmra.mxu0 %v600
        %v661 = vpop.f32.mrf.mxu0
        %v662 = vadd.f32 %v584, %v661
        %663 = vdwg.mxu0
        %664 = vxpose.xlu0.b32.start [1/16] %v624, 128
        %665 = vxpose.xlu0.b32.cont [2/16] 0.0, 128
        %666 = vxpose.xlu0.b32.cont [3/16] 0.0, 128
        %667 = vxpose.xlu0.b32.cont [4/16] 0.0, 128
        %668 = vxpose.xlu0.b32.cont [5/16] 0.0, 128
        %669 = vxpose.xlu0.b32.cont [6/16] 0.0, 128
        %670 = vxpose.xlu0.b32.cont [7/16] 0.0, 128
        %671 = vxpose.xlu0.b32.cont [8/16] 0.0, 128
        %672 = vxpose.xlu0.b32.cont [9/16] 0.0, 128
        %673 = vxpose.xlu0.b32.cont [10/16] 0.0, 128
        %674 = vxpose.xlu0.b32.cont [11/16] 0.0, 128
        %675 = vxpose.xlu0.b32.cont [12/16] 0.0, 128
        %676 = vxpose.xlu0.b32.cont [13/16] 0.0, 128
        %677 = vxpose.xlu0.b32.cont [14/16] 0.0, 128
        %678 = vxpose.xlu0.b32.cont [15/16] 0.0, 128
        %679 = vxpose.xlu0.b32.end [16/16] 0.0, 128
        %v680 = vpop.trf.xlu0
        %v681 = vpop.trf.xlu0
        %v682 = vpop.trf.xlu0
        %v683 = vpop.trf.xlu0
        %v684 = vpop.trf.xlu0
        %v685 = vpop.trf.xlu0
        %v686 = vpop.trf.xlu0
        %v687 = vpop.trf.xlu0
        %v688 = vpop.trf.xlu0
        %v689 = vpop.trf.xlu0
        %v690 = vpop.trf.xlu0
        %v691 = vpop.trf.xlu0
        %v692 = vpop.trf.xlu0
        %v693 = vpop.trf.xlu0
        %v694 = vpop.trf.xlu0
        %v695 = vpop.trf.xlu0
        %696 = vxpose.xlu0.b32.start [1/16] %v653, 128
        %697 = vxpose.xlu0.b32.cont [2/16] 0.0, 128
        %698 = vxpose.xlu0.b32.cont [3/16] 0.0, 128
        %699 = vxpose.xlu0.b32.cont [4/16] 0.0, 128
        %700 = vxpose.xlu0.b32.cont [5/16] 0.0, 128
        %701 = vxpose.xlu0.b32.cont [6/16] 0.0, 128
        %702 = vxpose.xlu0.b32.cont [7/16] 0.0, 128
        %703 = vxpose.xlu0.b32.cont [8/16] 0.0, 128
        %704 = vxpose.xlu0.b32.cont [9/16] 0.0, 128
        %705 = vxpose.xlu0.b32.cont [10/16] 0.0, 128
        %706 = vxpose.xlu0.b32.cont [11/16] 0.0, 128
        %707 = vxpose.xlu0.b32.cont [12/16] 0.0, 128
        %708 = vxpose.xlu0.b32.cont [13/16] 0.0, 128
        %709 = vxpose.xlu0.b32.cont [14/16] 0.0, 128
        %710 = vxpose.xlu0.b32.cont [15/16] 0.0, 128
        %711 = vxpose.xlu0.b32.end [16/16] 0.0, 128
        %v712 = vpop.trf.xlu0
        %v713 = vpop.trf.xlu0
        %v714 = vpop.trf.xlu0
        %v715 = vpop.trf.xlu0
        %v716 = vpop.trf.xlu0
        %v717 = vpop.trf.xlu0
        %v718 = vpop.trf.xlu0
        %v719 = vpop.trf.xlu0
        %v720 = vpop.trf.xlu0
        %v721 = vpop.trf.xlu0
        %v722 = vpop.trf.xlu0
        %v723 = vpop.trf.xlu0
        %v724 = vpop.trf.xlu0
        %v725 = vpop.trf.xlu0
        %v726 = vpop.trf.xlu0
        %v727 = vpop.trf.xlu0
        %vm728 = vcmask 64512
        %v730 = vsel %vm728, %v680, 0
        %v733 = vsel %vm728, %v681, 0
        %v736 = vsel %vm728, %v682, 0
        %v739 = vsel %vm728, %v683, 0
        %v742 = vsel %vm728, %v684, 0
        %v745 = vsel %vm728, %v685, 0
        %v748 = vsel %vm728, %v686, 0
        %v751 = vsel %vm728, %v687, 0
        %v754 = vsel %vm728, %v688, 0
        %v757 = vsel %vm728, %v689, 0
        %v760 = vsel %vm728, %v690, 0
        %v763 = vsel %vm728, %v691, 0
        %v766 = vsel %vm728, %v692, 0
        %v769 = vsel %vm728, %v693, 0
        %v772 = vsel %vm728, %v694, 0
        %v775 = vsel %vm728, %v695, 0
        %v778 = vsel %vm728, %v712, 0
        %v781 = vsel %vm728, %v713, 0
        %v784 = vsel %vm728, %v714, 0
        %v787 = vsel %vm728, %v715, 0
        %v790 = vsel %vm728, %v716, 0
        %v793 = vsel %vm728, %v717, 0
        %v796 = vsel %vm728, %v718, 0
        %v799 = vsel %vm728, %v719, 0
        %v802 = vsel %vm728, %v720, 0
        %v805 = vsel %vm728, %v721, 0
        %v808 = vsel %vm728, %v722, 0
        %v811 = vsel %vm728, %v723, 0
        %v814 = vsel %vm728, %v724, 0
        %v817 = vsel %vm728, %v725, 0
        %v820 = vsel %vm728, %v726, 0
        %v823 = vsel %vm728, %v727, 0
        %825 = vmatpush.msra.mxu0 0.0
        %826 = vmatpush.msra.mxu0 0.0
        %827 = vmatpush.msra.mxu0 0.0
        %828 = vmatpush.msra.mxu0 0.0
        %829 = vmatpush.msra.mxu0 0.0
        %830 = vmatpush.msra.mxu0 0.0
        %831 = vmatpush.msra.mxu0 0.0
        %832 = vmatpush.msra.mxu0 0.0
        %833 = vmatpush.msra.mxu0 0.0
        %834 = vmatpush.msra.mxu0 0.0
        %835 = vmatpush.msra.mxu0 0.0
        %836 = vmatpush.msra.mxu0 0.0
        %837 = vmatpush.msra.mxu0 0.0
        %838 = vmatpush.msra.mxu0 0.0
        %839 = vmatpush.msra.mxu0 0.0
        %840 = vmatpush.msra.mxu0 %v530
        %841 = vmatmul.f32.gmra.mxu0 %v730
        %v842 = vpop.f32.mrf.mxu0
        %v843 = vadd.f32 0.0, %v842
        %844 = vmatmul.f32.gmra.mxu0 %v733
        %v845 = vpop.f32.mrf.mxu0
        %v846 = vadd.f32 0.0, %v845
        %847 = vmatmul.f32.gmra.mxu0 %v736
        %v848 = vpop.f32.mrf.mxu0
        %v849 = vadd.f32 0.0, %v848
        %850 = vmatmul.f32.gmra.mxu0 %v739
        %v851 = vpop.f32.mrf.mxu0
        %v852 = vadd.f32 0.0, %v851
        %853 = vmatmul.f32.gmra.mxu0 %v742
        %v854 = vpop.f32.mrf.mxu0
        %v855 = vadd.f32 0.0, %v854
        %856 = vmatmul.f32.gmra.mxu0 %v745
        %v857 = vpop.f32.mrf.mxu0
        %v858 = vadd.f32 0.0, %v857
        %859 = vmatmul.f32.gmra.mxu0 %v748
        %v860 = vpop.f32.mrf.mxu0
        %v861 = vadd.f32 0.0, %v860
        %862 = vmatmul.f32.gmra.mxu0 %v751
        %v863 = vpop.f32.mrf.mxu0
        %v864 = vadd.f32 0.0, %v863
        %865 = vmatmul.f32.gmra.mxu0 %v754
        %v866 = vpop.f32.mrf.mxu0
        %v867 = vadd.f32 0.0, %v866
        %868 = vmatmul.f32.gmra.mxu0 %v757
        %v869 = vpop.f32.mrf.mxu0
        %v870 = vadd.f32 0.0, %v869
        %871 = vmatmul.f32.gmra.mxu0 %v760
        %v872 = vpop.f32.mrf.mxu0
        %v873 = vadd.f32 0.0, %v872
        %874 = vmatmul.f32.gmra.mxu0 %v763
        %v875 = vpop.f32.mrf.mxu0
        %v876 = vadd.f32 0.0, %v875
        %877 = vmatmul.f32.gmra.mxu0 %v766
        %v878 = vpop.f32.mrf.mxu0
        %v879 = vadd.f32 0.0, %v878
        %880 = vmatmul.f32.gmra.mxu0 %v769
        %v881 = vpop.f32.mrf.mxu0
        %v882 = vadd.f32 0.0, %v881
        %883 = vmatmul.f32.gmra.mxu0 %v772
        %v884 = vpop.f32.mrf.mxu0
        %v885 = vadd.f32 0.0, %v884
        %886 = vmatmul.f32.gmra.mxu0 %v775
        %v887 = vpop.f32.mrf.mxu0
        %v888 = vadd.f32 0.0, %v887
        %889 = vmatmul.f32.gmra.mxu0 %v778
        %v890 = vpop.f32.mrf.mxu0
        %v891 = vadd.f32 0.0, %v890
        %892 = vmatmul.f32.gmra.mxu0 %v781
        %v893 = vpop.f32.mrf.mxu0
        %v894 = vadd.f32 0.0, %v893
        %895 = vmatmul.f32.gmra.mxu0 %v784
        %v896 = vpop.f32.mrf.mxu0
        %v897 = vadd.f32 0.0, %v896
        %898 = vmatmul.f32.gmra.mxu0 %v787
        %v899 = vpop.f32.mrf.mxu0
        %v900 = vadd.f32 0.0, %v899
        %901 = vmatmul.f32.gmra.mxu0 %v790
        %v902 = vpop.f32.mrf.mxu0
        %v903 = vadd.f32 0.0, %v902
        %904 = vmatmul.f32.gmra.mxu0 %v793
        %v905 = vpop.f32.mrf.mxu0
        %v906 = vadd.f32 0.0, %v905
        %907 = vmatmul.f32.gmra.mxu0 %v796
        %v908 = vpop.f32.mrf.mxu0
        %v909 = vadd.f32 0.0, %v908
        %910 = vmatmul.f32.gmra.mxu0 %v799
        %v911 = vpop.f32.mrf.mxu0
        %v912 = vadd.f32 0.0, %v911
        %913 = vmatmul.f32.gmra.mxu0 %v802
        %v914 = vpop.f32.mrf.mxu0
        %v915 = vadd.f32 0.0, %v914
        %916 = vmatmul.f32.gmra.mxu0 %v805
        %v917 = vpop.f32.mrf.mxu0
        %v918 = vadd.f32 0.0, %v917
        %919 = vmatmul.f32.gmra.mxu0 %v808
        %v920 = vpop.f32.mrf.mxu0
        %v921 = vadd.f32 0.0, %v920
        %922 = vmatmul.f32.gmra.mxu0 %v811
        %v923 = vpop.f32.mrf.mxu0
        %v924 = vadd.f32 0.0, %v923
        %925 = vmatmul.f32.gmra.mxu0 %v814
        %v926 = vpop.f32.mrf.mxu0
        %v927 = vadd.f32 0.0, %v926
        %928 = vmatmul.f32.gmra.mxu0 %v817
        %v929 = vpop.f32.mrf.mxu0
        %v930 = vadd.f32 0.0, %v929
        %931 = vmatmul.f32.gmra.mxu0 %v820
        %v932 = vpop.f32.mrf.mxu0
        %v933 = vadd.f32 0.0, %v932
        %934 = vmatmul.f32.gmra.mxu0 %v823
        %v935 = vpop.f32.mrf.mxu0
        %v936 = vadd.f32 0.0, %v935
        %937 = vdwg.mxu0
        %938 = vmatpush.msra.mxu0 0.0
        %939 = vmatpush.msra.mxu0 0.0
        %940 = vmatpush.msra.mxu0 0.0
        %941 = vmatpush.msra.mxu0 0.0
        %942 = vmatpush.msra.mxu0 0.0
        %943 = vmatpush.msra.mxu0 0.0
        %944 = vmatpush.msra.mxu0 0.0
        %945 = vmatpush.msra.mxu0 0.0
        %946 = vmatpush.msra.mxu0 0.0
        %947 = vmatpush.msra.mxu0 0.0
        %948 = vmatpush.msra.mxu0 0.0
        %949 = vmatpush.msra.mxu0 0.0
        %950 = vmatpush.msra.mxu0 0.0
        %951 = vmatpush.msra.mxu0 0.0
        %952 = vmatpush.msra.mxu0 0.0
        %953 = vmatpush.msra.mxu0 %v553
        %954 = vmatmul.f32.gmra.mxu0 %v730
        %v955 = vpop.f32.mrf.mxu0
        %v956 = vadd.f32 0.0, %v955
        %957 = vmatmul.f32.gmra.mxu0 %v733
        %v958 = vpop.f32.mrf.mxu0
        %v959 = vadd.f32 0.0, %v958
        %960 = vmatmul.f32.gmra.mxu0 %v736
        %v961 = vpop.f32.mrf.mxu0
        %v962 = vadd.f32 0.0, %v961
        %963 = vmatmul.f32.gmra.mxu0 %v739
        %v964 = vpop.f32.mrf.mxu0
        %v965 = vadd.f32 0.0, %v964
        %966 = vmatmul.f32.gmra.mxu0 %v742
        %v967 = vpop.f32.mrf.mxu0
        %v968 = vadd.f32 0.0, %v967
        %969 = vmatmul.f32.gmra.mxu0 %v745
        %v970 = vpop.f32.mrf.mxu0
        %v971 = vadd.f32 0.0, %v970
        %972 = vmatmul.f32.gmra.mxu0 %v748
        %v973 = vpop.f32.mrf.mxu0
        %v974 = vadd.f32 0.0, %v973
        %975 = vmatmul.f32.gmra.mxu0 %v751
        %v976 = vpop.f32.mrf.mxu0
        %v977 = vadd.f32 0.0, %v976
        %978 = vmatmul.f32.gmra.mxu0 %v754
        %v979 = vpop.f32.mrf.mxu0
        %v980 = vadd.f32 0.0, %v979
        %981 = vmatmul.f32.gmra.mxu0 %v757
        %v982 = vpop.f32.mrf.mxu0
        %v983 = vadd.f32 0.0, %v982
        %984 = vmatmul.f32.gmra.mxu0 %v760
        %v985 = vpop.f32.mrf.mxu0
        %v986 = vadd.f32 0.0, %v985
        %987 = vmatmul.f32.gmra.mxu0 %v763
        %v988 = vpop.f32.mrf.mxu0
        %v989 = vadd.f32 0.0, %v988
        %990 = vmatmul.f32.gmra.mxu0 %v766
        %v991 = vpop.f32.mrf.mxu0
        %v992 = vadd.f32 0.0, %v991
        %993 = vmatmul.f32.gmra.mxu0 %v769
        %v994 = vpop.f32.mrf.mxu0
        %v995 = vadd.f32 0.0, %v994
        %996 = vmatmul.f32.gmra.mxu0 %v772
        %v997 = vpop.f32.mrf.mxu0
        %v998 = vadd.f32 0.0, %v997
        %999 = vmatmul.f32.gmra.mxu0 %v775
        %v1000 = vpop.f32.mrf.mxu0
        %v1001 = vadd.f32 0.0, %v1000
        %1002 = vmatmul.f32.gmra.mxu0 %v778
        %v1003 = vpop.f32.mrf.mxu0
        %v1004 = vadd.f32 0.0, %v1003
        %1005 = vmatmul.f32.gmra.mxu0 %v781
        %v1006 = vpop.f32.mrf.mxu0
        %v1007 = vadd.f32 0.0, %v1006
        %1008 = vmatmul.f32.gmra.mxu0 %v784
        %v1009 = vpop.f32.mrf.mxu0
        %v1010 = vadd.f32 0.0, %v1009
        %1011 = vmatmul.f32.gmra.mxu0 %v787
        %v1012 = vpop.f32.mrf.mxu0
        %v1013 = vadd.f32 0.0, %v1012
        %1014 = vmatmul.f32.gmra.mxu0 %v790
        %v1015 = vpop.f32.mrf.mxu0
        %v1016 = vadd.f32 0.0, %v1015
        %1017 = vmatmul.f32.gmra.mxu0 %v793
        %v1018 = vpop.f32.mrf.mxu0
        %v1019 = vadd.f32 0.0, %v1018
        %1020 = vmatmul.f32.gmra.mxu0 %v796
        %v1021 = vpop.f32.mrf.mxu0
        %v1022 = vadd.f32 0.0, %v1021
        %1023 = vmatmul.f32.gmra.mxu0 %v799
        %v1024 = vpop.f32.mrf.mxu0
        %v1025 = vadd.f32 0.0, %v1024
        %1026 = vmatmul.f32.gmra.mxu0 %v802
        %v1027 = vpop.f32.mrf.mxu0
        %v1028 = vadd.f32 0.0, %v1027
        %1029 = vmatmul.f32.gmra.mxu0 %v805
        %v1030 = vpop.f32.mrf.mxu0
        %v1031 = vadd.f32 0.0, %v1030
        %1032 = vmatmul.f32.gmra.mxu0 %v808
        %v1033 = vpop.f32.mrf.mxu0
        %v1034 = vadd.f32 0.0, %v1033
        %1035 = vmatmul.f32.gmra.mxu0 %v811
        %v1036 = vpop.f32.mrf.mxu0
        %v1037 = vadd.f32 0.0, %v1036
        %1038 = vmatmul.f32.gmra.mxu0 %v814
        %v1039 = vpop.f32.mrf.mxu0
        %v1040 = vadd.f32 0.0, %v1039
        %1041 = vmatmul.f32.gmra.mxu0 %v817
        %v1042 = vpop.f32.mrf.mxu0
        %v1043 = vadd.f32 0.0, %v1042
        %1044 = vmatmul.f32.gmra.mxu0 %v820
        %v1045 = vpop.f32.mrf.mxu0
        %v1046 = vadd.f32 0.0, %v1045
        %1047 = vmatmul.f32.gmra.mxu0 %v823
        %v1048 = vpop.f32.mrf.mxu0
        %v1049 = vadd.f32 0.0, %v1048
        %1050 = vdwg.mxu0
        %v1051 = vmul.f32 %v843, 0.35355338
        %v1052 = vmul.f32 %v956, 0.35355338
        %v1053 = vmul.f32 %v846, 0.35355338
        %v1054 = vmul.f32 %v959, 0.35355338
        %v1055 = vmul.f32 %v849, 0.35355338
        %v1056 = vmul.f32 %v962, 0.35355338
        %v1057 = vmul.f32 %v852, 0.35355338
        %v1058 = vmul.f32 %v965, 0.35355338
        %v1059 = vmul.f32 %v855, 0.35355338
        %v1060 = vmul.f32 %v968, 0.35355338
        %v1061 = vmul.f32 %v858, 0.35355338
        %v1062 = vmul.f32 %v971, 0.35355338
        %v1063 = vmul.f32 %v861, 0.35355338
        %v1064 = vmul.f32 %v974, 0.35355338
        %v1065 = vmul.f32 %v864, 0.35355338
        %v1066 = vmul.f32 %v977, 0.35355338
        %v1067 = vmul.f32 %v867, 0.35355338
        %v1068 = vmul.f32 %v980, 0.35355338
        %v1069 = vmul.f32 %v870, 0.35355338
        %v1070 = vmul.f32 %v983, 0.35355338
        %v1071 = vmul.f32 %v873, 0.35355338
        %v1072 = vmul.f32 %v986, 0.35355338
        %v1073 = vmul.f32 %v876, 0.35355338
        %v1074 = vmul.f32 %v989, 0.35355338
        %v1075 = vmul.f32 %v879, 0.35355338
        %v1076 = vmul.f32 %v992, 0.35355338
        %v1077 = vmul.f32 %v882, 0.35355338
        %v1078 = vmul.f32 %v995, 0.35355338
        %v1079 = vmul.f32 %v885, 0.35355338
        %v1080 = vmul.f32 %v998, 0.35355338
        %v1081 = vmul.f32 %v888, 0.35355338
        %v1082 = vmul.f32 %v1001, 0.35355338
        %v1083 = vmul.f32 %v891, 0.35355338
        %v1084 = vmul.f32 %v1004, 0.35355338
        %v1085 = vmul.f32 %v894, 0.35355338
        %v1086 = vmul.f32 %v1007, 0.35355338
        %v1087 = vmul.f32 %v897, 0.35355338
        %v1088 = vmul.f32 %v1010, 0.35355338
        %v1089 = vmul.f32 %v900, 0.35355338
        %v1090 = vmul.f32 %v1013, 0.35355338
        %v1091 = vmul.f32 %v903, 0.35355338
        %v1092 = vmul.f32 %v1016, 0.35355338
        %v1093 = vmul.f32 %v906, 0.35355338
        %v1094 = vmul.f32 %v1019, 0.35355338
        %v1095 = vmul.f32 %v909, 0.35355338
        %v1096 = vmul.f32 %v1022, 0.35355338
        %v1097 = vmul.f32 %v912, 0.35355338
        %v1098 = vmul.f32 %v1025, 0.35355338
        %v1099 = vmul.f32 %v915, 0.35355338
        %v1100 = vmul.f32 %v1028, 0.35355338
        %v1101 = vmul.f32 %v918, 0.35355338
        %v1102 = vmul.f32 %v1031, 0.35355338
        %v1103 = vmul.f32 %v921, 0.35355338
        %v1104 = vmul.f32 %v1034, 0.35355338
        %v1105 = vmul.f32 %v924, 0.35355338
        %v1106 = vmul.f32 %v1037, 0.35355338
        %v1107 = vmul.f32 %v927, 0.35355338
        %v1108 = vmul.f32 %v1040, 0.35355338
        %v1109 = vmul.f32 %v930, 0.35355338
        %v1110 = vmul.f32 %v1043, 0.35355338
        %v1111 = vmul.f32 %v933, 0.35355338
        %v1112 = vmul.f32 %v1046, 0.35355338
        %v1113 = vmul.f32 %v936, 0.35355338
        %v1114 = vmul.f32 %v1049, 0.35355338
        %v1115 = vmax.f32 %v1051, %v1055
        %v1116 = vmax.f32 %v1053, %v1057
        %v1117 = vmax.f32 %v1115, %v1059
        %v1118 = vmax.f32 %v1116, %v1061
        %v1119 = vmax.f32 %v1117, %v1063
        %v1120 = vmax.f32 %v1118, %v1065
        %v1121 = vmax.f32 %v1119, %v1067
        %v1122 = vmax.f32 %v1120, %v1069
        %v1123 = vmax.f32 %v1121, %v1071
        %v1124 = vmax.f32 %v1122, %v1073
        %v1125 = vmax.f32 %v1123, %v1075
        %v1126 = vmax.f32 %v1124, %v1077
        %v1127 = vmax.f32 %v1125, %v1079
        %v1128 = vmax.f32 %v1126, %v1081
        %v1129 = vmax.f32 %v1127, %v1083
        %v1130 = vmax.f32 %v1128, %v1085
        %v1131 = vmax.f32 %v1129, %v1087
        %v1132 = vmax.f32 %v1130, %v1089
        %v1133 = vmax.f32 %v1131, %v1091
        %v1134 = vmax.f32 %v1132, %v1093
        %v1135 = vmax.f32 %v1133, %v1095
        %v1136 = vmax.f32 %v1134, %v1097
        %v1137 = vmax.f32 %v1135, %v1099
        %v1138 = vmax.f32 %v1136, %v1101
        %v1139 = vmax.f32 %v1137, %v1103
        %v1140 = vmax.f32 %v1138, %v1105
        %v1141 = vmax.f32 %v1139, %v1107
        %v1142 = vmax.f32 %v1140, %v1109
        %v1143 = vmax.f32 %v1141, %v1111
        %v1144 = vmax.f32 %v1142, %v1113
        %v1145 = vmax.f32 %v1143, %v1144
        %v1146 = vrot.slane %v1145, 4
        %v1147 = vmax.f32 %v1145, %v1146
        %v1148 = vrot.slane %v1147, 2
        %v1149 = vmax.f32 %v1147, %v1148
        %v1150 = vrot.slane %v1149, 1
        %v1151 = vmax.f32 %v1149, %v1150
        %v1152 = vmax.f32 %v1052, %v1056
        %v1153 = vmax.f32 %v1054, %v1058
        %v1154 = vmax.f32 %v1152, %v1060
        %v1155 = vmax.f32 %v1153, %v1062
        %v1156 = vmax.f32 %v1154, %v1064
        %v1157 = vmax.f32 %v1155, %v1066
        %v1158 = vmax.f32 %v1156, %v1068
        %v1159 = vmax.f32 %v1157, %v1070
        %v1160 = vmax.f32 %v1158, %v1072
        %v1161 = vmax.f32 %v1159, %v1074
        %v1162 = vmax.f32 %v1160, %v1076
        %v1163 = vmax.f32 %v1161, %v1078
        %v1164 = vmax.f32 %v1162, %v1080
        %v1165 = vmax.f32 %v1163, %v1082
        %v1166 = vmax.f32 %v1164, %v1084
        %v1167 = vmax.f32 %v1165, %v1086
        %v1168 = vmax.f32 %v1166, %v1088
        %v1169 = vmax.f32 %v1167, %v1090
        %v1170 = vmax.f32 %v1168, %v1092
        %v1171 = vmax.f32 %v1169, %v1094
        %v1172 = vmax.f32 %v1170, %v1096
        %v1173 = vmax.f32 %v1171, %v1098
        %v1174 = vmax.f32 %v1172, %v1100
        %v1175 = vmax.f32 %v1173, %v1102
        %v1176 = vmax.f32 %v1174, %v1104
        %v1177 = vmax.f32 %v1175, %v1106
        %v1178 = vmax.f32 %v1176, %v1108
        %v1179 = vmax.f32 %v1177, %v1110
        %v1180 = vmax.f32 %v1178, %v1112
        %v1181 = vmax.f32 %v1179, %v1114
        %v1182 = vmax.f32 %v1180, %v1181
        %v1183 = vrot.slane %v1182, 4
        %v1184 = vmax.f32 %v1182, %v1183
        %v1185 = vrot.slane %v1184, 2
        %v1186 = vmax.f32 %v1184, %v1185
        %v1187 = vrot.slane %v1186, 1
        %v1188 = vmax.f32 %v1186, %v1187
        %v1189 = vsub.f32 %v1051, %v1151
        %v1190 = vsub.f32 %v1052, %v1188
        %v1191 = vsub.f32 %v1053, %v1151
        %v1192 = vsub.f32 %v1054, %v1188
        %v1193 = vsub.f32 %v1055, %v1151
        %v1194 = vsub.f32 %v1056, %v1188
        %v1195 = vsub.f32 %v1057, %v1151
        %v1196 = vsub.f32 %v1058, %v1188
        %v1197 = vsub.f32 %v1059, %v1151
        %v1198 = vsub.f32 %v1060, %v1188
        %v1199 = vsub.f32 %v1061, %v1151
        %v1200 = vsub.f32 %v1062, %v1188
        %v1201 = vsub.f32 %v1063, %v1151
        %v1202 = vsub.f32 %v1064, %v1188
        %v1203 = vsub.f32 %v1065, %v1151
        %v1204 = vsub.f32 %v1066, %v1188
        %v1205 = vsub.f32 %v1067, %v1151
        %v1206 = vsub.f32 %v1068, %v1188
        %v1207 = vsub.f32 %v1069, %v1151
        %v1208 = vsub.f32 %v1070, %v1188
        %v1209 = vsub.f32 %v1071, %v1151
        %v1210 = vsub.f32 %v1072, %v1188
        %v1211 = vsub.f32 %v1073, %v1151
        %v1212 = vsub.f32 %v1074, %v1188
        %v1213 = vsub.f32 %v1075, %v1151
        %v1214 = vsub.f32 %v1076, %v1188
        %v1215 = vsub.f32 %v1077, %v1151
        %v1216 = vsub.f32 %v1078, %v1188
        %v1217 = vsub.f32 %v1079, %v1151
        %v1218 = vsub.f32 %v1080, %v1188
        %v1219 = vsub.f32 %v1081, %v1151
        %v1220 = vsub.f32 %v1082, %v1188
        %v1221 = vsub.f32 %v1083, %v1151
        %v1222 = vsub.f32 %v1084, %v1188
        %v1223 = vsub.f32 %v1085, %v1151
        %v1224 = vsub.f32 %v1086, %v1188
        %v1225 = vsub.f32 %v1087, %v1151
        %v1226 = vsub.f32 %v1088, %v1188
        %v1227 = vsub.f32 %v1089, %v1151
        %v1228 = vsub.f32 %v1090, %v1188
        %v1229 = vsub.f32 %v1091, %v1151
        %v1230 = vsub.f32 %v1092, %v1188
        %v1231 = vsub.f32 %v1093, %v1151
        %v1232 = vsub.f32 %v1094, %v1188
        %v1233 = vsub.f32 %v1095, %v1151
        %v1234 = vsub.f32 %v1096, %v1188
        %v1235 = vsub.f32 %v1097, %v1151
        %v1236 = vsub.f32 %v1098, %v1188
        %v1237 = vsub.f32 %v1099, %v1151
        %v1238 = vsub.f32 %v1100, %v1188
        %v1239 = vsub.f32 %v1101, %v1151
        %v1240 = vsub.f32 %v1102, %v1188
        %v1241 = vsub.f32 %v1103, %v1151
        %v1242 = vsub.f32 %v1104, %v1188
        %v1243 = vsub.f32 %v1105, %v1151
        %v1244 = vsub.f32 %v1106, %v1188
        %v1245 = vsub.f32 %v1107, %v1151
        %v1246 = vsub.f32 %v1108, %v1188
        %v1247 = vsub.f32 %v1109, %v1151
        %v1248 = vsub.f32 %v1110, %v1188
        %v1249 = vsub.f32 %v1111, %v1151
        %v1250 = vsub.f32 %v1112, %v1188
        %v1251 = vsub.f32 %v1113, %v1151
        %v1252 = vsub.f32 %v1114, %v1188
        %v1253 = vmul.f32 %v1189, 1.442695
        %v1254 = vpow.pop %v1253
        %v1255 = vmul.f32 %v1190, 1.442695
        %v1256 = vpow.pop %v1255
        %v1257 = vmul.f32 %v1191, 1.442695
        %v1258 = vpow.pop %v1257
        %v1259 = vmul.f32 %v1192, 1.442695
        %v1260 = vpow.pop %v1259
        %v1261 = vmul.f32 %v1193, 1.442695
        %v1262 = vpow.pop %v1261
        %v1263 = vmul.f32 %v1194, 1.442695
        %v1264 = vpow.pop %v1263
        %v1265 = vmul.f32 %v1195, 1.442695
        %v1266 = vpow.pop %v1265
        %v1267 = vmul.f32 %v1196, 1.442695
        %v1268 = vpow.pop %v1267
        %v1269 = vmul.f32 %v1197, 1.442695
        %v1270 = vpow.pop %v1269
        %v1271 = vmul.f32 %v1198, 1.442695
        %v1272 = vpow.pop %v1271
        %v1273 = vmul.f32 %v1199, 1.442695
        %v1274 = vpow.pop %v1273
        %v1275 = vmul.f32 %v1200, 1.442695
        %v1276 = vpow.pop %v1275
        %v1277 = vmul.f32 %v1201, 1.442695
        %v1278 = vpow.pop %v1277
        %v1279 = vmul.f32 %v1202, 1.442695
        %v1280 = vpow.pop %v1279
        %v1281 = vmul.f32 %v1203, 1.442695
        %v1282 = vpow.pop %v1281
        %v1283 = vmul.f32 %v1204, 1.442695
        %v1284 = vpow.pop %v1283
        %v1285 = vmul.f32 %v1205, 1.442695
        %v1286 = vpow.pop %v1285
        %v1287 = vmul.f32 %v1206, 1.442695
        %v1288 = vpow.pop %v1287
        %v1289 = vmul.f32 %v1207, 1.442695
        %v1290 = vpow.pop %v1289
        %v1291 = vmul.f32 %v1208, 1.442695
        %v1292 = vpow.pop %v1291
        %v1293 = vmul.f32 %v1209, 1.442695
        %v1294 = vpow.pop %v1293
        %v1295 = vmul.f32 %v1210, 1.442695
        %v1296 = vpow.pop %v1295
        %v1297 = vmul.f32 %v1211, 1.442695
        %v1298 = vpow.pop %v1297
        %v1299 = vmul.f32 %v1212, 1.442695
        %v1300 = vpow.pop %v1299
        %v1301 = vmul.f32 %v1213, 1.442695
        %v1302 = vpow.pop %v1301
        %v1303 = vmul.f32 %v1214, 1.442695
        %v1304 = vpow.pop %v1303
        %v1305 = vmul.f32 %v1215, 1.442695
        %v1306 = vpow.pop %v1305
        %v1307 = vmul.f32 %v1216, 1.442695
        %v1308 = vpow.pop %v1307
        %v1309 = vmul.f32 %v1217, 1.442695
        %v1310 = vpow.pop %v1309
        %v1311 = vmul.f32 %v1218, 1.442695
        %v1312 = vpow.pop %v1311
        %v1313 = vmul.f32 %v1219, 1.442695
        %v1314 = vpow.pop %v1313
        %v1315 = vmul.f32 %v1220, 1.442695
        %v1316 = vpow.pop %v1315
        %v1317 = vmul.f32 %v1221, 1.442695
        %v1318 = vpow.pop %v1317
        %v1319 = vmul.f32 %v1222, 1.442695
        %v1320 = vpow.pop %v1319
        %v1321 = vmul.f32 %v1223, 1.442695
        %v1322 = vpow.pop %v1321
        %v1323 = vmul.f32 %v1224, 1.442695
        %v1324 = vpow.pop %v1323
        %v1325 = vmul.f32 %v1225, 1.442695
        %v1326 = vpow.pop %v1325
        %v1327 = vmul.f32 %v1226, 1.442695
        %v1328 = vpow.pop %v1327
        %v1329 = vmul.f32 %v1227, 1.442695
        %v1330 = vpow.pop %v1329
        %v1331 = vmul.f32 %v1228, 1.442695
        %v1332 = vpow.pop %v1331
        %v1333 = vmul.f32 %v1229, 1.442695
        %v1334 = vpow.pop %v1333
        %v1335 = vmul.f32 %v1230, 1.442695
        %v1336 = vpow.pop %v1335
        %v1337 = vmul.f32 %v1231, 1.442695
        %v1338 = vpow.pop %v1337
        %v1339 = vmul.f32 %v1232, 1.442695
        %v1340 = vpow.pop %v1339
        %v1341 = vmul.f32 %v1233, 1.442695
        %v1342 = vpow.pop %v1341
        %v1343 = vmul.f32 %v1234, 1.442695
        %v1344 = vpow.pop %v1343
        %v1345 = vmul.f32 %v1235, 1.442695
        %v1346 = vpow.pop %v1345
        %v1347 = vmul.f32 %v1236, 1.442695
        %v1348 = vpow.pop %v1347
        %v1349 = vmul.f32 %v1237, 1.442695
        %v1350 = vpow.pop %v1349
        %v1351 = vmul.f32 %v1238, 1.442695
        %v1352 = vpow.pop %v1351
        %v1353 = vmul.f32 %v1239, 1.442695
        %v1354 = vpow.pop %v1353
        %v1355 = vmul.f32 %v1240, 1.442695
        %v1356 = vpow.pop %v1355
        %v1357 = vmul.f32 %v1241, 1.442695
        %v1358 = vpow.pop %v1357
        %v1359 = vmul.f32 %v1242, 1.442695
        %v1360 = vpow.pop %v1359
        %v1361 = vmul.f32 %v1243, 1.442695
        %v1362 = vpow.pop %v1361
        %v1363 = vmul.f32 %v1244, 1.442695
        %v1364 = vpow.pop %v1363
        %v1365 = vmul.f32 %v1245, 1.442695
        %v1366 = vpow.pop %v1365
        %v1367 = vmul.f32 %v1246, 1.442695
        %v1368 = vpow.pop %v1367
        %v1369 = vmul.f32 %v1247, 1.442695
        %v1370 = vpow.pop %v1369
        %v1371 = vmul.f32 %v1248, 1.442695
        %v1372 = vpow.pop %v1371
        %v1373 = vmul.f32 %v1249, 1.442695
        %v1374 = vpow.pop %v1373
        %v1375 = vmul.f32 %v1250, 1.442695
        %v1376 = vpow.pop %v1375
        %v1377 = vmul.f32 %v1251, 1.442695
        %v1378 = vpow.pop %v1377
        %v1379 = vmul.f32 %v1252, 1.442695
        %v1380 = vpow.pop %v1379
        %v1381 = vadd.f32 %v1254, %v1258
        %v1382 = vadd.f32 %v1381, %v1262
        %v1383 = vadd.f32 %v1382, %v1266
        %v1384 = vadd.f32 %v1383, %v1270
        %v1385 = vadd.f32 %v1384, %v1274
        %v1386 = vadd.f32 %v1385, %v1278
        %v1387 = vadd.f32 %v1386, %v1282
        %v1388 = vadd.f32 %v1387, %v1286
        %v1389 = vadd.f32 %v1388, %v1290
        %v1390 = vadd.f32 %v1389, %v1294
        %v1391 = vadd.f32 %v1390, %v1298
        %v1392 = vadd.f32 %v1391, %v1302
        %v1393 = vadd.f32 %v1392, %v1306
        %v1394 = vadd.f32 %v1393, %v1310
        %v1395 = vadd.f32 %v1394, %v1314
        %v1396 = vadd.f32 %v1395, %v1318
        %v1397 = vadd.f32 %v1396, %v1322
        %v1398 = vadd.f32 %v1397, %v1326
        %v1399 = vadd.f32 %v1398, %v1330
        %v1400 = vadd.f32 %v1399, %v1334
        %v1401 = vadd.f32 %v1400, %v1338
        %v1402 = vadd.f32 %v1401, %v1342
        %v1403 = vadd.f32 %v1402, %v1346
        %v1404 = vadd.f32 %v1403, %v1350
        %v1405 = vadd.f32 %v1404, %v1354
        %v1406 = vadd.f32 %v1405, %v1358
        %v1407 = vadd.f32 %v1406, %v1362
        %v1408 = vadd.f32 %v1407, %v1366
        %v1409 = vadd.f32 %v1408, %v1370
        %v1410 = vadd.f32 %v1409, %v1374
        %v1411 = vadd.f32 %v1410, %v1378
        %v1412 = vrot.slane %v1411, 4
        %v1413 = vadd.f32 %v1411, %v1412
        %v1414 = vrot.slane %v1413, 2
        %v1415 = vadd.f32 %v1413, %v1414
        %v1416 = vrot.slane %v1415, 1
        %v1417 = vadd.f32 %v1415, %v1416
        %v1418 = vadd.f32 %v1256, %v1260
        %v1419 = vadd.f32 %v1418, %v1264
        %v1420 = vadd.f32 %v1419, %v1268
        %v1421 = vadd.f32 %v1420, %v1272
        %v1422 = vadd.f32 %v1421, %v1276
        %v1423 = vadd.f32 %v1422, %v1280
        %v1424 = vadd.f32 %v1423, %v1284
        %v1425 = vadd.f32 %v1424, %v1288
        %v1426 = vadd.f32 %v1425, %v1292
        %v1427 = vadd.f32 %v1426, %v1296
        %v1428 = vadd.f32 %v1427, %v1300
        %v1429 = vadd.f32 %v1428, %v1304
        %v1430 = vadd.f32 %v1429, %v1308
        %v1431 = vadd.f32 %v1430, %v1312
        %v1432 = vadd.f32 %v1431, %v1316
        %v1433 = vadd.f32 %v1432, %v1320
        %v1434 = vadd.f32 %v1433, %v1324
        %v1435 = vadd.f32 %v1434, %v1328
        %v1436 = vadd.f32 %v1435, %v1332
        %v1437 = vadd.f32 %v1436, %v1336
        %v1438 = vadd.f32 %v1437, %v1340
        %v1439 = vadd.f32 %v1438, %v1344
        %v1440 = vadd.f32 %v1439, %v1348
        %v1441 = vadd.f32 %v1440, %v1352
        %v1442 = vadd.f32 %v1441, %v1356
        %v1443 = vadd.f32 %v1442, %v1360
        %v1444 = vadd.f32 %v1443, %v1364
        %v1445 = vadd.f32 %v1444, %v1368
        %v1446 = vadd.f32 %v1445, %v1372
        %v1447 = vadd.f32 %v1446, %v1376
        %v1448 = vadd.f32 %v1447, %v1380
        %v1449 = vrot.slane %v1448, 4
        %v1450 = vadd.f32 %v1448, %v1449
        %v1451 = vrot.slane %v1450, 2
        %v1452 = vadd.f32 %v1450, %v1451
        %v1453 = vrot.slane %v1452, 1
        %v1454 = vadd.f32 %v1452, %v1453
        %1455 = vmatpush.msra.mxu0 %v1314
        %1456 = vmatpush.msra.mxu0 %v1310
        %1457 = vmatpush.msra.mxu0 %v1306
        %1458 = vmatpush.msra.mxu0 %v1302
        %1459 = vmatpush.msra.mxu0 %v1298
        %1460 = vmatpush.msra.mxu0 %v1294
        %1461 = vmatpush.msra.mxu0 %v1290
        %1462 = vmatpush.msra.mxu0 %v1286
        %1463 = vmatpush.msra.mxu0 %v1282
        %1464 = vmatpush.msra.mxu0 %v1278
        %1465 = vmatpush.msra.mxu0 %v1274
        %1466 = vmatpush.msra.mxu0 %v1270
        %1467 = vmatpush.msra.mxu0 %v1266
        %1468 = vmatpush.msra.mxu0 %v1262
        %1469 = vmatpush.msra.mxu0 %v1258
        %1470 = vmatpush.msra.mxu0 %v1254
        %1471 = vmatmul.f32.gmra.mxu0 %v630
        %v1472 = vpop.f32.mrf.mxu0
        %v1473 = vadd.f32 0.0, %v1472
        %1474 = vdwg.mxu0
        %1475 = vmatpush.msra.mxu0 %v1378
        %1476 = vmatpush.msra.mxu0 %v1374
        %1477 = vmatpush.msra.mxu0 %v1370
        %1478 = vmatpush.msra.mxu0 %v1366
        %1479 = vmatpush.msra.mxu0 %v1362
        %1480 = vmatpush.msra.mxu0 %v1358
        %1481 = vmatpush.msra.mxu0 %v1354
        %1482 = vmatpush.msra.mxu0 %v1350
        %1483 = vmatpush.msra.mxu0 %v1346
        %1484 = vmatpush.msra.mxu0 %v1342
        %1485 = vmatpush.msra.mxu0 %v1338
        %1486 = vmatpush.msra.mxu0 %v1334
        %1487 = vmatpush.msra.mxu0 %v1330
        %1488 = vmatpush.msra.mxu0 %v1326
        %1489 = vmatpush.msra.mxu0 %v1322
        %1490 = vmatpush.msra.mxu0 %v1318
        %1491 = vmatmul.f32.gmra.mxu0 %v659
        %v1492 = vpop.f32.mrf.mxu0
        %v1493 = vadd.f32 %v1473, %v1492
        %1494 = vdwg.mxu0
        %1495 = vmatpush.msra.mxu0 %v1316
        %1496 = vmatpush.msra.mxu0 %v1312
        %1497 = vmatpush.msra.mxu0 %v1308
        %1498 = vmatpush.msra.mxu0 %v1304
        %1499 = vmatpush.msra.mxu0 %v1300
        %1500 = vmatpush.msra.mxu0 %v1296
        %1501 = vmatpush.msra.mxu0 %v1292
        %1502 = vmatpush.msra.mxu0 %v1288
        %1503 = vmatpush.msra.mxu0 %v1284
        %1504 = vmatpush.msra.mxu0 %v1280
        %1505 = vmatpush.msra.mxu0 %v1276
        %1506 = vmatpush.msra.mxu0 %v1272
        %1507 = vmatpush.msra.mxu0 %v1268
        %1508 = vmatpush.msra.mxu0 %v1264
        %1509 = vmatpush.msra.mxu0 %v1260
        %1510 = vmatpush.msra.mxu0 %v1256
        %1511 = vmatmul.f32.gmra.mxu0 %v630
        %v1512 = vpop.f32.mrf.mxu0
        %v1513 = vadd.f32 0.0, %v1512
        %1514 = vdwg.mxu0
        %1515 = vmatpush.msra.mxu0 %v1380
        %1516 = vmatpush.msra.mxu0 %v1376
        %1517 = vmatpush.msra.mxu0 %v1372
        %1518 = vmatpush.msra.mxu0 %v1368
        %1519 = vmatpush.msra.mxu0 %v1364
        %1520 = vmatpush.msra.mxu0 %v1360
        %1521 = vmatpush.msra.mxu0 %v1356
        %1522 = vmatpush.msra.mxu0 %v1352
        %1523 = vmatpush.msra.mxu0 %v1348
        %1524 = vmatpush.msra.mxu0 %v1344
        %1525 = vmatpush.msra.mxu0 %v1340
        %1526 = vmatpush.msra.mxu0 %v1336
        %1527 = vmatpush.msra.mxu0 %v1332
        %1528 = vmatpush.msra.mxu0 %v1328
        %1529 = vmatpush.msra.mxu0 %v1324
        %1530 = vmatpush.msra.mxu0 %v1320
        %1531 = vmatmul.f32.gmra.mxu0 %v659
        %v1532 = vpop.f32.mrf.mxu0
        %v1533 = vadd.f32 %v1513, %v1532
        %1534 = vdwg.mxu0
        %v1535 = vrcp.pop %v1417
        %v1536 = vrcp.pop %v1454
        %v1537 = vmul.f32 %v1493, %v1535
        %v1538 = vmul.f32 %v1533, %v1536
        %1539 = vxpose.xlu0.b32.start [1/16] %v627, 128
        %1540 = vxpose.xlu0.b32.cont [2/16] 0.0, 128
        %1541 = vxpose.xlu0.b32.cont [3/16] 0.0, 128
        %1542 = vxpose.xlu0.b32.cont [4/16] 0.0, 128
        %1543 = vxpose.xlu0.b32.cont [5/16] 0.0, 128
        %1544 = vxpose.xlu0.b32.cont [6/16] 0.0, 128
        %1545 = vxpose.xlu0.b32.cont [7/16] 0.0, 128
        %1546 = vxpose.xlu0.b32.cont [8/16] 0.0, 128
        %1547 = vxpose.xlu0.b32.cont [9/16] 0.0, 128
        %1548 = vxpose.xlu0.b32.cont [10/16] 0.0, 128
        %1549 = vxpose.xlu0.b32.cont [11/16] 0.0, 128
        %1550 = vxpose.xlu0.b32.cont [12/16] 0.0, 128
        %1551 = vxpose.xlu0.b32.cont [13/16] 0.0, 128
        %1552 = vxpose.xlu0.b32.cont [14/16] 0.0, 128
        %1553 = vxpose.xlu0.b32.cont [15/16] 0.0, 128
        %1554 = vxpose.xlu0.b32.end [16/16] 0.0, 128
        %v1555 = vpop.trf.xlu0
        %v1556 = vpop.trf.xlu0
        %v1557 = vpop.trf.xlu0
        %v1558 = vpop.trf.xlu0
        %v1559 = vpop.trf.xlu0
        %v1560 = vpop.trf.xlu0
        %v1561 = vpop.trf.xlu0
        %v1562 = vpop.trf.xlu0
        %v1563 = vpop.trf.xlu0
        %v1564 = vpop.trf.xlu0
        %v1565 = vpop.trf.xlu0
        %v1566 = vpop.trf.xlu0
        %v1567 = vpop.trf.xlu0
        %v1568 = vpop.trf.xlu0
        %v1569 = vpop.trf.xlu0
        %v1570 = vpop.trf.xlu0
        %1571 = vxpose.xlu0.b32.start [1/16] %v656, 128
        %1572 = vxpose.xlu0.b32.cont [2/16] 0.0, 128
        %1573 = vxpose.xlu0.b32.cont [3/16] 0.0, 128
        %1574 = vxpose.xlu0.b32.cont [4/16] 0.0, 128
        %1575 = vxpose.xlu0.b32.cont [5/16] 0.0, 128
        %1576 = vxpose.xlu0.b32.cont [6/16] 0.0, 128
        %1577 = vxpose.xlu0.b32.cont [7/16] 0.0, 128
        %1578 = vxpose.xlu0.b32.cont [8/16] 0.0, 128
        %1579 = vxpose.xlu0.b32.cont [9/16] 0.0, 128
        %1580 = vxpose.xlu0.b32.cont [10/16] 0.0, 128
        %1581 = vxpose.xlu0.b32.cont [11/16] 0.0, 128
        %1582 = vxpose.xlu0.b32.cont [12/16] 0.0, 128
        %1583 = vxpose.xlu0.b32.cont [13/16] 0.0, 128
        %1584 = vxpose.xlu0.b32.cont [14/16] 0.0, 128
        %1585 = vxpose.xlu0.b32.cont [15/16] 0.0, 128
        %1586 = vxpose.xlu0.b32.end [16/16] 0.0, 128
        %v1587 = vpop.trf.xlu0
        %v1588 = vpop.trf.xlu0
        %v1589 = vpop.trf.xlu0
        %v1590 = vpop.trf.xlu0
        %v1591 = vpop.trf.xlu0
        %v1592 = vpop.trf.xlu0
        %v1593 = vpop.trf.xlu0
        %v1594 = vpop.trf.xlu0
        %v1595 = vpop.trf.xlu0
        %v1596 = vpop.trf.xlu0
        %v1597 = vpop.trf.xlu0
        %v1598 = vpop.trf.xlu0
        %v1599 = vpop.trf.xlu0
        %v1600 = vpop.trf.xlu0
        %v1601 = vpop.trf.xlu0
        %v1602 = vpop.trf.xlu0
        %v1604 = vsel %vm728, %v1555, 0
        %v1607 = vsel %vm728, %v1556, 0
        %v1610 = vsel %vm728, %v1557, 0
        %v1613 = vsel %vm728, %v1558, 0
        %v1616 = vsel %vm728, %v1559, 0
        %v1619 = vsel %vm728, %v1560, 0
        %v1622 = vsel %vm728, %v1561, 0
        %v1625 = vsel %vm728, %v1562, 0
        %v1628 = vsel %vm728, %v1563, 0
        %v1631 = vsel %vm728, %v1564, 0
        %v1634 = vsel %vm728, %v1565, 0
        %v1637 = vsel %vm728, %v1566, 0
        %v1640 = vsel %vm728, %v1567, 0
        %v1643 = vsel %vm728, %v1568, 0
        %v1646 = vsel %vm728, %v1569, 0
        %v1649 = vsel %vm728, %v1570, 0
        %v1652 = vsel %vm728, %v1587, 0
        %v1655 = vsel %vm728, %v1588, 0
        %v1658 = vsel %vm728, %v1589, 0
        %v1661 = vsel %vm728, %v1590, 0
        %v1664 = vsel %vm728, %v1591, 0
        %v1667 = vsel %vm728, %v1592, 0
        %v1670 = vsel %vm728, %v1593, 0
        %v1673 = vsel %vm728, %v1594, 0
        %v1676 = vsel %vm728, %v1595, 0
        %v1679 = vsel %vm728, %v1596, 0
        %v1682 = vsel %vm728, %v1597, 0
        %v1685 = vsel %vm728, %v1598, 0
        %v1688 = vsel %vm728, %v1599, 0
        %v1691 = vsel %vm728, %v1600, 0
        %v1694 = vsel %vm728, %v1601, 0
        %v1697 = vsel %vm728, %v1602, 0
        %1699 = vmatpush.msra.mxu0 0.0
        %1700 = vmatpush.msra.mxu0 0.0
        %1701 = vmatpush.msra.mxu0 0.0
        %1702 = vmatpush.msra.mxu0 0.0
        %1703 = vmatpush.msra.mxu0 0.0
        %1704 = vmatpush.msra.mxu0 0.0
        %1705 = vmatpush.msra.mxu0 0.0
        %1706 = vmatpush.msra.mxu0 0.0
        %1707 = vmatpush.msra.mxu0 0.0
        %1708 = vmatpush.msra.mxu0 0.0
        %1709 = vmatpush.msra.mxu0 0.0
        %1710 = vmatpush.msra.mxu0 0.0
        %1711 = vmatpush.msra.mxu0 0.0
        %1712 = vmatpush.msra.mxu0 0.0
        %1713 = vmatpush.msra.mxu0 0.0
        %1714 = vmatpush.msra.mxu0 %v533
        %1715 = vmatmul.f32.gmra.mxu0 %v1604
        %v1716 = vpop.f32.mrf.mxu0
        %v1717 = vadd.f32 0.0, %v1716
        %1718 = vmatmul.f32.gmra.mxu0 %v1607
        %v1719 = vpop.f32.mrf.mxu0
        %v1720 = vadd.f32 0.0, %v1719
        %1721 = vmatmul.f32.gmra.mxu0 %v1610
        %v1722 = vpop.f32.mrf.mxu0
        %v1723 = vadd.f32 0.0, %v1722
        %1724 = vmatmul.f32.gmra.mxu0 %v1613
        %v1725 = vpop.f32.mrf.mxu0
        %v1726 = vadd.f32 0.0, %v1725
        %1727 = vmatmul.f32.gmra.mxu0 %v1616
        %v1728 = vpop.f32.mrf.mxu0
        %v1729 = vadd.f32 0.0, %v1728
        %1730 = vmatmul.f32.gmra.mxu0 %v1619
        %v1731 = vpop.f32.mrf.mxu0
        %v1732 = vadd.f32 0.0, %v1731
        %1733 = vmatmul.f32.gmra.mxu0 %v1622
        %v1734 = vpop.f32.mrf.mxu0
        %v1735 = vadd.f32 0.0, %v1734
        %1736 = vmatmul.f32.gmra.mxu0 %v1625
        %v1737 = vpop.f32.mrf.mxu0
        %v1738 = vadd.f32 0.0, %v1737
        %1739 = vmatmul.f32.gmra.mxu0 %v1628
        %v1740 = vpop.f32.mrf.mxu0
        %v1741 = vadd.f32 0.0, %v1740
        %1742 = vmatmul.f32.gmra.mxu0 %v1631
        %v1743 = vpop.f32.mrf.mxu0
        %v1744 = vadd.f32 0.0, %v1743
        %1745 = vmatmul.f32.gmra.mxu0 %v1634
        %v1746 = vpop.f32.mrf.mxu0
        %v1747 = vadd.f32 0.0, %v1746
        %1748 = vmatmul.f32.gmra.mxu0 %v1637
        %v1749 = vpop.f32.mrf.mxu0
        %v1750 = vadd.f32 0.0, %v1749
        %1751 = vmatmul.f32.gmra.mxu0 %v1640
        %v1752 = vpop.f32.mrf.mxu0
        %v1753 = vadd.f32 0.0, %v1752
        %1754 = vmatmul.f32.gmra.mxu0 %v1643
        %v1755 = vpop.f32.mrf.mxu0
        %v1756 = vadd.f32 0.0, %v1755
        %1757 = vmatmul.f32.gmra.mxu0 %v1646
        %v1758 = vpop.f32.mrf.mxu0
        %v1759 = vadd.f32 0.0, %v1758
        %1760 = vmatmul.f32.gmra.mxu0 %v1649
        %v1761 = vpop.f32.mrf.mxu0
        %v1762 = vadd.f32 0.0, %v1761
        %1763 = vmatmul.f32.gmra.mxu0 %v1652
        %v1764 = vpop.f32.mrf.mxu0
        %v1765 = vadd.f32 0.0, %v1764
        %1766 = vmatmul.f32.gmra.mxu0 %v1655
        %v1767 = vpop.f32.mrf.mxu0
        %v1768 = vadd.f32 0.0, %v1767
        %1769 = vmatmul.f32.gmra.mxu0 %v1658
        %v1770 = vpop.f32.mrf.mxu0
        %v1771 = vadd.f32 0.0, %v1770
        %1772 = vmatmul.f32.gmra.mxu0 %v1661
        %v1773 = vpop.f32.mrf.mxu0
        %v1774 = vadd.f32 0.0, %v1773
        %1775 = vmatmul.f32.gmra.mxu0 %v1664
        %v1776 = vpop.f32.mrf.mxu0
        %v1777 = vadd.f32 0.0, %v1776
        %1778 = vmatmul.f32.gmra.mxu0 %v1667
        %v1779 = vpop.f32.mrf.mxu0
        %v1780 = vadd.f32 0.0, %v1779
        %1781 = vmatmul.f32.gmra.mxu0 %v1670
        %v1782 = vpop.f32.mrf.mxu0
        %v1783 = vadd.f32 0.0, %v1782
        %1784 = vmatmul.f32.gmra.mxu0 %v1673
        %v1785 = vpop.f32.mrf.mxu0
        %v1786 = vadd.f32 0.0, %v1785
        %1787 = vmatmul.f32.gmra.mxu0 %v1676
        %v1788 = vpop.f32.mrf.mxu0
        %v1789 = vadd.f32 0.0, %v1788
        %1790 = vmatmul.f32.gmra.mxu0 %v1679
        %v1791 = vpop.f32.mrf.mxu0
        %v1792 = vadd.f32 0.0, %v1791
        %1793 = vmatmul.f32.gmra.mxu0 %v1682
        %v1794 = vpop.f32.mrf.mxu0
        %v1795 = vadd.f32 0.0, %v1794
        %1796 = vmatmul.f32.gmra.mxu0 %v1685
        %v1797 = vpop.f32.mrf.mxu0
        %v1798 = vadd.f32 0.0, %v1797
        %1799 = vmatmul.f32.gmra.mxu0 %v1688
        %v1800 = vpop.f32.mrf.mxu0
        %v1801 = vadd.f32 0.0, %v1800
        %1802 = vmatmul.f32.gmra.mxu0 %v1691
        %v1803 = vpop.f32.mrf.mxu0
        %v1804 = vadd.f32 0.0, %v1803
        %1805 = vmatmul.f32.gmra.mxu0 %v1694
        %v1806 = vpop.f32.mrf.mxu0
        %v1807 = vadd.f32 0.0, %v1806
        %1808 = vmatmul.f32.gmra.mxu0 %v1697
        %v1809 = vpop.f32.mrf.mxu0
        %v1810 = vadd.f32 0.0, %v1809
        %1811 = vdwg.mxu0
        %1812 = vmatpush.msra.mxu0 0.0
        %1813 = vmatpush.msra.mxu0 0.0
        %1814 = vmatpush.msra.mxu0 0.0
        %1815 = vmatpush.msra.mxu0 0.0
        %1816 = vmatpush.msra.mxu0 0.0
        %1817 = vmatpush.msra.mxu0 0.0
        %1818 = vmatpush.msra.mxu0 0.0
        %1819 = vmatpush.msra.mxu0 0.0
        %1820 = vmatpush.msra.mxu0 0.0
        %1821 = vmatpush.msra.mxu0 0.0
        %1822 = vmatpush.msra.mxu0 0.0
        %1823 = vmatpush.msra.mxu0 0.0
        %1824 = vmatpush.msra.mxu0 0.0
        %1825 = vmatpush.msra.mxu0 0.0
        %1826 = vmatpush.msra.mxu0 0.0
        %1827 = vmatpush.msra.mxu0 %v556
        %1828 = vmatmul.f32.gmra.mxu0 %v1604
        %v1829 = vpop.f32.mrf.mxu0
        %v1830 = vadd.f32 0.0, %v1829
        %1831 = vmatmul.f32.gmra.mxu0 %v1607
        %v1832 = vpop.f32.mrf.mxu0
        %v1833 = vadd.f32 0.0, %v1832
        %1834 = vmatmul.f32.gmra.mxu0 %v1610
        %v1835 = vpop.f32.mrf.mxu0
        %v1836 = vadd.f32 0.0, %v1835
        %1837 = vmatmul.f32.gmra.mxu0 %v1613
        %v1838 = vpop.f32.mrf.mxu0
        %v1839 = vadd.f32 0.0, %v1838
        %1840 = vmatmul.f32.gmra.mxu0 %v1616
        %v1841 = vpop.f32.mrf.mxu0
        %v1842 = vadd.f32 0.0, %v1841
        %1843 = vmatmul.f32.gmra.mxu0 %v1619
        %v1844 = vpop.f32.mrf.mxu0
        %v1845 = vadd.f32 0.0, %v1844
        %1846 = vmatmul.f32.gmra.mxu0 %v1622
        %v1847 = vpop.f32.mrf.mxu0
        %v1848 = vadd.f32 0.0, %v1847
        %1849 = vmatmul.f32.gmra.mxu0 %v1625
        %v1850 = vpop.f32.mrf.mxu0
        %v1851 = vadd.f32 0.0, %v1850
        %1852 = vmatmul.f32.gmra.mxu0 %v1628
        %v1853 = vpop.f32.mrf.mxu0
        %v1854 = vadd.f32 0.0, %v1853
        %1855 = vmatmul.f32.gmra.mxu0 %v1631
        %v1856 = vpop.f32.mrf.mxu0
        %v1857 = vadd.f32 0.0, %v1856
        %1858 = vmatmul.f32.gmra.mxu0 %v1634
        %v1859 = vpop.f32.mrf.mxu0
        %v1860 = vadd.f32 0.0, %v1859
        %1861 = vmatmul.f32.gmra.mxu0 %v1637
        %v1862 = vpop.f32.mrf.mxu0
        %v1863 = vadd.f32 0.0, %v1862
        %1864 = vmatmul.f32.gmra.mxu0 %v1640
        %v1865 = vpop.f32.mrf.mxu0
        %v1866 = vadd.f32 0.0, %v1865
        %1867 = vmatmul.f32.gmra.mxu0 %v1643
        %v1868 = vpop.f32.mrf.mxu0
        %v1869 = vadd.f32 0.0, %v1868
        %1870 = vmatmul.f32.gmra.mxu0 %v1646
        %v1871 = vpop.f32.mrf.mxu0
        %v1872 = vadd.f32 0.0, %v1871
        %1873 = vmatmul.f32.gmra.mxu0 %v1649
        %v1874 = vpop.f32.mrf.mxu0
        %v1875 = vadd.f32 0.0, %v1874
        %1876 = vmatmul.f32.gmra.mxu0 %v1652
        %v1877 = vpop.f32.mrf.mxu0
        %v1878 = vadd.f32 0.0, %v1877
        %1879 = vmatmul.f32.gmra.mxu0 %v1655
        %v1880 = vpop.f32.mrf.mxu0
        %v1881 = vadd.f32 0.0, %v1880
        %1882 = vmatmul.f32.gmra.mxu0 %v1658
        %v1883 = vpop.f32.mrf.mxu0
        %v1884 = vadd.f32 0.0, %v1883
        %1885 = vmatmul.f32.gmra.mxu0 %v1661
        %v1886 = vpop.f32.mrf.mxu0
        %v1887 = vadd.f32 0.0, %v1886
        %1888 = vmatmul.f32.gmra.mxu0 %v1664
        %v1889 = vpop.f32.mrf.mxu0
        %v1890 = vadd.f32 0.0, %v1889
        %1891 = vmatmul.f32.gmra.mxu0 %v1667
        %v1892 = vpop.f32.mrf.mxu0
        %v1893 = vadd.f32 0.0, %v1892
        %1894 = vmatmul.f32.gmra.mxu0 %v1670
        %v1895 = vpop.f32.mrf.mxu0
        %v1896 = vadd.f32 0.0, %v1895
        %1897 = vmatmul.f32.gmra.mxu0 %v1673
        %v1898 = vpop.f32.mrf.mxu0
        %v1899 = vadd.f32 0.0, %v1898
        %1900 = vmatmul.f32.gmra.mxu0 %v1676
        %v1901 = vpop.f32.mrf.mxu0
        %v1902 = vadd.f32 0.0, %v1901
        %1903 = vmatmul.f32.gmra.mxu0 %v1679
        %v1904 = vpop.f32.mrf.mxu0
        %v1905 = vadd.f32 0.0, %v1904
        %1906 = vmatmul.f32.gmra.mxu0 %v1682
        %v1907 = vpop.f32.mrf.mxu0
        %v1908 = vadd.f32 0.0, %v1907
        %1909 = vmatmul.f32.gmra.mxu0 %v1685
        %v1910 = vpop.f32.mrf.mxu0
        %v1911 = vadd.f32 0.0, %v1910
        %1912 = vmatmul.f32.gmra.mxu0 %v1688
        %v1913 = vpop.f32.mrf.mxu0
        %v1914 = vadd.f32 0.0, %v1913
        %1915 = vmatmul.f32.gmra.mxu0 %v1691
        %v1916 = vpop.f32.mrf.mxu0
        %v1917 = vadd.f32 0.0, %v1916
        %1918 = vmatmul.f32.gmra.mxu0 %v1694
        %v1919 = vpop.f32.mrf.mxu0
        %v1920 = vadd.f32 0.0, %v1919
        %1921 = vmatmul.f32.gmra.mxu0 %v1697
        %v1922 = vpop.f32.mrf.mxu0
        %v1923 = vadd.f32 0.0, %v1922
        %1924 = vdwg.mxu0
        %v1925 = vmul.f32 %v1717, 0.35355338
        %v1926 = vmul.f32 %v1830, 0.35355338
        %v1927 = vmul.f32 %v1720, 0.35355338
        %v1928 = vmul.f32 %v1833, 0.35355338
        %v1929 = vmul.f32 %v1723, 0.35355338
        %v1930 = vmul.f32 %v1836, 0.35355338
        %v1931 = vmul.f32 %v1726, 0.35355338
        %v1932 = vmul.f32 %v1839, 0.35355338
        %v1933 = vmul.f32 %v1729, 0.35355338
        %v1934 = vmul.f32 %v1842, 0.35355338
        %v1935 = vmul.f32 %v1732, 0.35355338
        %v1936 = vmul.f32 %v1845, 0.35355338
        %v1937 = vmul.f32 %v1735, 0.35355338
        %v1938 = vmul.f32 %v1848, 0.35355338
        %v1939 = vmul.f32 %v1738, 0.35355338
        %v1940 = vmul.f32 %v1851, 0.35355338
        %v1941 = vmul.f32 %v1741, 0.35355338
        %v1942 = vmul.f32 %v1854, 0.35355338
        %v1943 = vmul.f32 %v1744, 0.35355338
        %v1944 = vmul.f32 %v1857, 0.35355338
        %v1945 = vmul.f32 %v1747, 0.35355338
        %v1946 = vmul.f32 %v1860, 0.35355338
        %v1947 = vmul.f32 %v1750, 0.35355338
        %v1948 = vmul.f32 %v1863, 0.35355338
        %v1949 = vmul.f32 %v1753, 0.35355338
        %v1950 = vmul.f32 %v1866, 0.35355338
        %v1951 = vmul.f32 %v1756, 0.35355338
        %v1952 = vmul.f32 %v1869, 0.35355338
        %v1953 = vmul.f32 %v1759, 0.35355338
        %v1954 = vmul.f32 %v1872, 0.35355338
        %v1955 = vmul.f32 %v1762, 0.35355338
        %v1956 = vmul.f32 %v1875, 0.35355338
        %v1957 = vmul.f32 %v1765, 0.35355338
        %v1958 = vmul.f32 %v1878, 0.35355338
        %v1959 = vmul.f32 %v1768, 0.35355338
        %v1960 = vmul.f32 %v1881, 0.35355338
        %v1961 = vmul.f32 %v1771, 0.35355338
        %v1962 = vmul.f32 %v1884, 0.35355338
        %v1963 = vmul.f32 %v1774, 0.35355338
        %v1964 = vmul.f32 %v1887, 0.35355338
        %v1965 = vmul.f32 %v1777, 0.35355338
        %v1966 = vmul.f32 %v1890, 0.35355338
        %v1967 = vmul.f32 %v1780, 0.35355338
        %v1968 = vmul.f32 %v1893, 0.35355338
        %v1969 = vmul.f32 %v1783, 0.35355338
        %v1970 = vmul.f32 %v1896, 0.35355338
        %v1971 = vmul.f32 %v1786, 0.35355338
        %v1972 = vmul.f32 %v1899, 0.35355338
        %v1973 = vmul.f32 %v1789, 0.35355338
        %v1974 = vmul.f32 %v1902, 0.35355338
        %v1975 = vmul.f32 %v1792, 0.35355338
        %v1976 = vmul.f32 %v1905, 0.35355338
        %v1977 = vmul.f32 %v1795, 0.35355338
        %v1978 = vmul.f32 %v1908, 0.35355338
        %v1979 = vmul.f32 %v1798, 0.35355338
        %v1980 = vmul.f32 %v1911, 0.35355338
        %v1981 = vmul.f32 %v1801, 0.35355338
        %v1982 = vmul.f32 %v1914, 0.35355338
        %v1983 = vmul.f32 %v1804, 0.35355338
        %v1984 = vmul.f32 %v1917, 0.35355338
        %v1985 = vmul.f32 %v1807, 0.35355338
        %v1986 = vmul.f32 %v1920, 0.35355338
        %v1987 = vmul.f32 %v1810, 0.35355338
        %v1988 = vmul.f32 %v1923, 0.35355338
        %v1989 = vmax.f32 %v1925, %v1929
        %v1990 = vmax.f32 %v1927, %v1931
        %v1991 = vmax.f32 %v1989, %v1933
        %v1992 = vmax.f32 %v1990, %v1935
        %v1993 = vmax.f32 %v1991, %v1937
        %v1994 = vmax.f32 %v1992, %v1939
        %v1995 = vmax.f32 %v1993, %v1941
        %v1996 = vmax.f32 %v1994, %v1943
        %v1997 = vmax.f32 %v1995, %v1945
        %v1998 = vmax.f32 %v1996, %v1947
        %v1999 = vmax.f32 %v1997, %v1949
        %v2000 = vmax.f32 %v1998, %v1951
        %v2001 = vmax.f32 %v1999, %v1953
        %v2002 = vmax.f32 %v2000, %v1955
        %v2003 = vmax.f32 %v2001, %v1957
        %v2004 = vmax.f32 %v2002, %v1959
        %v2005 = vmax.f32 %v2003, %v1961
        %v2006 = vmax.f32 %v2004, %v1963
        %v2007 = vmax.f32 %v2005, %v1965
        %v2008 = vmax.f32 %v2006, %v1967
        %v2009 = vmax.f32 %v2007, %v1969
        %v2010 = vmax.f32 %v2008, %v1971
        %v2011 = vmax.f32 %v2009, %v1973
        %v2012 = vmax.f32 %v2010, %v1975
        %v2013 = vmax.f32 %v2011, %v1977
        %v2014 = vmax.f32 %v2012, %v1979
        %v2015 = vmax.f32 %v2013, %v1981
        %v2016 = vmax.f32 %v2014, %v1983
        %v2017 = vmax.f32 %v2015, %v1985
        %v2018 = vmax.f32 %v2016, %v1987
        %v2019 = vmax.f32 %v2017, %v2018
        %v2020 = vrot.slane %v2019, 4
        %v2021 = vmax.f32 %v2019, %v2020
        %v2022 = vrot.slane %v2021, 2
        %v2023 = vmax.f32 %v2021, %v2022
        %v2024 = vrot.slane %v2023, 1
        %v2025 = vmax.f32 %v2023, %v2024
        %v2026 = vmax.f32 %v1926, %v1930
        %v2027 = vmax.f32 %v1928, %v1932
        %v2028 = vmax.f32 %v2026, %v1934
        %v2029 = vmax.f32 %v2027, %v1936
        %v2030 = vmax.f32 %v2028, %v1938
        %v2031 = vmax.f32 %v2029, %v1940
        %v2032 = vmax.f32 %v2030, %v1942
        %v2033 = vmax.f32 %v2031, %v1944
        %v2034 = vmax.f32 %v2032, %v1946
        %v2035 = vmax.f32 %v2033, %v1948
        %v2036 = vmax.f32 %v2034, %v1950
        %v2037 = vmax.f32 %v2035, %v1952
        %v2038 = vmax.f32 %v2036, %v1954
        %v2039 = vmax.f32 %v2037, %v1956
        %v2040 = vmax.f32 %v2038, %v1958
        %v2041 = vmax.f32 %v2039, %v1960
        %v2042 = vmax.f32 %v2040, %v1962
        %v2043 = vmax.f32 %v2041, %v1964
        %v2044 = vmax.f32 %v2042, %v1966
        %v2045 = vmax.f32 %v2043, %v1968
        %v2046 = vmax.f32 %v2044, %v1970
        %v2047 = vmax.f32 %v2045, %v1972
        %v2048 = vmax.f32 %v2046, %v1974
        %v2049 = vmax.f32 %v2047, %v1976
        %v2050 = vmax.f32 %v2048, %v1978
        %v2051 = vmax.f32 %v2049, %v1980
        %v2052 = vmax.f32 %v2050, %v1982
        %v2053 = vmax.f32 %v2051, %v1984
        %v2054 = vmax.f32 %v2052, %v1986
        %v2055 = vmax.f32 %v2053, %v1988
        %v2056 = vmax.f32 %v2054, %v2055
        %v2057 = vrot.slane %v2056, 4
        %v2058 = vmax.f32 %v2056, %v2057
        %v2059 = vrot.slane %v2058, 2
        %v2060 = vmax.f32 %v2058, %v2059
        %v2061 = vrot.slane %v2060, 1
        %v2062 = vmax.f32 %v2060, %v2061
        %v2063 = vsub.f32 %v1925, %v2025
        %v2064 = vsub.f32 %v1926, %v2062
        %v2065 = vsub.f32 %v1927, %v2025
        %v2066 = vsub.f32 %v1928, %v2062
        %v2067 = vsub.f32 %v1929, %v2025
        %v2068 = vsub.f32 %v1930, %v2062
        %v2069 = vsub.f32 %v1931, %v2025
        %v2070 = vsub.f32 %v1932, %v2062
        %v2071 = vsub.f32 %v1933, %v2025
        %v2072 = vsub.f32 %v1934, %v2062
        %v2073 = vsub.f32 %v1935, %v2025
        %v2074 = vsub.f32 %v1936, %v2062
        %v2075 = vsub.f32 %v1937, %v2025
        %v2076 = vsub.f32 %v1938, %v2062
        %v2077 = vsub.f32 %v1939, %v2025
        %v2078 = vsub.f32 %v1940, %v2062
        %v2079 = vsub.f32 %v1941, %v2025
        %v2080 = vsub.f32 %v1942, %v2062
        %v2081 = vsub.f32 %v1943, %v2025
        %v2082 = vsub.f32 %v1944, %v2062
        %v2083 = vsub.f32 %v1945, %v2025
        %v2084 = vsub.f32 %v1946, %v2062
        %v2085 = vsub.f32 %v1947, %v2025
        %v2086 = vsub.f32 %v1948, %v2062
        %v2087 = vsub.f32 %v1949, %v2025
        %v2088 = vsub.f32 %v1950, %v2062
        %v2089 = vsub.f32 %v1951, %v2025
        %v2090 = vsub.f32 %v1952, %v2062
        %v2091 = vsub.f32 %v1953, %v2025
        %v2092 = vsub.f32 %v1954, %v2062
        %v2093 = vsub.f32 %v1955, %v2025
        %v2094 = vsub.f32 %v1956, %v2062
        %v2095 = vsub.f32 %v1957, %v2025
        %v2096 = vsub.f32 %v1958, %v2062
        %v2097 = vsub.f32 %v1959, %v2025
        %v2098 = vsub.f32 %v1960, %v2062
        %v2099 = vsub.f32 %v1961, %v2025
        %v2100 = vsub.f32 %v1962, %v2062
        %v2101 = vsub.f32 %v1963, %v2025
        %v2102 = vsub.f32 %v1964, %v2062
        %v2103 = vsub.f32 %v1965, %v2025
        %v2104 = vsub.f32 %v1966, %v2062
        %v2105 = vsub.f32 %v1967, %v2025
        %v2106 = vsub.f32 %v1968, %v2062
        %v2107 = vsub.f32 %v1969, %v2025
        %v2108 = vsub.f32 %v1970, %v2062
        %v2109 = vsub.f32 %v1971, %v2025
        %v2110 = vsub.f32 %v1972, %v2062
        %v2111 = vsub.f32 %v1973, %v2025
        %v2112 = vsub.f32 %v1974, %v2062
        %v2113 = vsub.f32 %v1975, %v2025
        %v2114 = vsub.f32 %v1976, %v2062
        %v2115 = vsub.f32 %v1977, %v2025
        %v2116 = vsub.f32 %v1978, %v2062
        %v2117 = vsub.f32 %v1979, %v2025
        %v2118 = vsub.f32 %v1980, %v2062
        %v2119 = vsub.f32 %v1981, %v2025
        %v2120 = vsub.f32 %v1982, %v2062
        %v2121 = vsub.f32 %v1983, %v2025
        %v2122 = vsub.f32 %v1984, %v2062
        %v2123 = vsub.f32 %v1985, %v2025
        %v2124 = vsub.f32 %v1986, %v2062
        %v2125 = vsub.f32 %v1987, %v2025
        %v2126 = vsub.f32 %v1988, %v2062
        %v2127 = vmul.f32 %v2063, 1.442695
        %v2128 = vpow.pop %v2127
        %v2129 = vmul.f32 %v2064, 1.442695
        %v2130 = vpow.pop %v2129
        %v2131 = vmul.f32 %v2065, 1.442695
        %v2132 = vpow.pop %v2131
        %v2133 = vmul.f32 %v2066, 1.442695
        %v2134 = vpow.pop %v2133
        %v2135 = vmul.f32 %v2067, 1.442695
        %v2136 = vpow.pop %v2135
        %v2137 = vmul.f32 %v2068, 1.442695
        %v2138 = vpow.pop %v2137
        %v2139 = vmul.f32 %v2069, 1.442695
        %v2140 = vpow.pop %v2139
        %v2141 = vmul.f32 %v2070, 1.442695
        %v2142 = vpow.pop %v2141
        %v2143 = vmul.f32 %v2071, 1.442695
        %v2144 = vpow.pop %v2143
        %v2145 = vmul.f32 %v2072, 1.442695
        %v2146 = vpow.pop %v2145
        %v2147 = vmul.f32 %v2073, 1.442695
        %v2148 = vpow.pop %v2147
        %v2149 = vmul.f32 %v2074, 1.442695
        %v2150 = vpow.pop %v2149
        %v2151 = vmul.f32 %v2075, 1.442695
        %v2152 = vpow.pop %v2151
        %v2153 = vmul.f32 %v2076, 1.442695
        %v2154 = vpow.pop %v2153
        %v2155 = vmul.f32 %v2077, 1.442695
        %v2156 = vpow.pop %v2155
        %v2157 = vmul.f32 %v2078, 1.442695
        %v2158 = vpow.pop %v2157
        %v2159 = vmul.f32 %v2079, 1.442695
        %v2160 = vpow.pop %v2159
        %v2161 = vmul.f32 %v2080, 1.442695
        %v2162 = vpow.pop %v2161
        %v2163 = vmul.f32 %v2081, 1.442695
        %v2164 = vpow.pop %v2163
        %v2165 = vmul.f32 %v2082, 1.442695
        %v2166 = vpow.pop %v2165
        %v2167 = vmul.f32 %v2083, 1.442695
        %v2168 = vpow.pop %v2167
        %v2169 = vmul.f32 %v2084, 1.442695
        %v2170 = vpow.pop %v2169
        %v2171 = vmul.f32 %v2085, 1.442695
        %v2172 = vpow.pop %v2171
        %v2173 = vmul.f32 %v2086, 1.442695
        %v2174 = vpow.pop %v2173
        %v2175 = vmul.f32 %v2087, 1.442695
        %v2176 = vpow.pop %v2175
        %v2177 = vmul.f32 %v2088, 1.442695
        %v2178 = vpow.pop %v2177
        %v2179 = vmul.f32 %v2089, 1.442695
        %v2180 = vpow.pop %v2179
        %v2181 = vmul.f32 %v2090, 1.442695
        %v2182 = vpow.pop %v2181
        %v2183 = vmul.f32 %v2091, 1.442695
        %v2184 = vpow.pop %v2183
        %v2185 = vmul.f32 %v2092, 1.442695
        %v2186 = vpow.pop %v2185
        %v2187 = vmul.f32 %v2093, 1.442695
        %v2188 = vpow.pop %v2187
        %v2189 = vmul.f32 %v2094, 1.442695
        %v2190 = vpow.pop %v2189
        %v2191 = vmul.f32 %v2095, 1.442695
        %v2192 = vpow.pop %v2191
        %v2193 = vmul.f32 %v2096, 1.442695
        %v2194 = vpow.pop %v2193
        %v2195 = vmul.f32 %v2097, 1.442695
        %v2196 = vpow.pop %v2195
        %v2197 = vmul.f32 %v2098, 1.442695
        %v2198 = vpow.pop %v2197
        %v2199 = vmul.f32 %v2099, 1.442695
        %v2200 = vpow.pop %v2199
        %v2201 = vmul.f32 %v2100, 1.442695
        %v2202 = vpow.pop %v2201
        %v2203 = vmul.f32 %v2101, 1.442695
        %v2204 = vpow.pop %v2203
        %v2205 = vmul.f32 %v2102, 1.442695
        %v2206 = vpow.pop %v2205
        %v2207 = vmul.f32 %v2103, 1.442695
        %v2208 = vpow.pop %v2207
        %v2209 = vmul.f32 %v2104, 1.442695
        %v2210 = vpow.pop %v2209
        %v2211 = vmul.f32 %v2105, 1.442695
        %v2212 = vpow.pop %v2211
        %v2213 = vmul.f32 %v2106, 1.442695
        %v2214 = vpow.pop %v2213
        %v2215 = vmul.f32 %v2107, 1.442695
        %v2216 = vpow.pop %v2215
        %v2217 = vmul.f32 %v2108, 1.442695
        %v2218 = vpow.pop %v2217
        %v2219 = vmul.f32 %v2109, 1.442695
        %v2220 = vpow.pop %v2219
        %v2221 = vmul.f32 %v2110, 1.442695
        %v2222 = vpow.pop %v2221
        %v2223 = vmul.f32 %v2111, 1.442695
        %v2224 = vpow.pop %v2223
        %v2225 = vmul.f32 %v2112, 1.442695
        %v2226 = vpow.pop %v2225
        %v2227 = vmul.f32 %v2113, 1.442695
        %v2228 = vpow.pop %v2227
        %v2229 = vmul.f32 %v2114, 1.442695
        %v2230 = vpow.pop %v2229
        %v2231 = vmul.f32 %v2115, 1.442695
        %v2232 = vpow.pop %v2231
        %v2233 = vmul.f32 %v2116, 1.442695
        %v2234 = vpow.pop %v2233
        %v2235 = vmul.f32 %v2117, 1.442695
        %v2236 = vpow.pop %v2235
        %v2237 = vmul.f32 %v2118, 1.442695
        %v2238 = vpow.pop %v2237
        %v2239 = vmul.f32 %v2119, 1.442695
        %v2240 = vpow.pop %v2239
        %v2241 = vmul.f32 %v2120, 1.442695
        %v2242 = vpow.pop %v2241
        %v2243 = vmul.f32 %v2121, 1.442695
        %v2244 = vpow.pop %v2243
        %v2245 = vmul.f32 %v2122, 1.442695
        %v2246 = vpow.pop %v2245
        %v2247 = vmul.f32 %v2123, 1.442695
        %v2248 = vpow.pop %v2247
        %v2249 = vmul.f32 %v2124, 1.442695
        %v2250 = vpow.pop %v2249
        %v2251 = vmul.f32 %v2125, 1.442695
        %v2252 = vpow.pop %v2251
        %v2253 = vmul.f32 %v2126, 1.442695
        %v2254 = vpow.pop %v2253
        %v2255 = vadd.f32 %v2128, %v2132
        %v2256 = vadd.f32 %v2255, %v2136
        %v2257 = vadd.f32 %v2256, %v2140
        %v2258 = vadd.f32 %v2257, %v2144
        %v2259 = vadd.f32 %v2258, %v2148
        %v2260 = vadd.f32 %v2259, %v2152
        %v2261 = vadd.f32 %v2260, %v2156
        %v2262 = vadd.f32 %v2261, %v2160
        %v2263 = vadd.f32 %v2262, %v2164
        %v2264 = vadd.f32 %v2263, %v2168
        %v2265 = vadd.f32 %v2264, %v2172
        %v2266 = vadd.f32 %v2265, %v2176
        %v2267 = vadd.f32 %v2266, %v2180
        %v2268 = vadd.f32 %v2267, %v2184
        %v2269 = vadd.f32 %v2268, %v2188
        %v2270 = vadd.f32 %v2269, %v2192
        %v2271 = vadd.f32 %v2270, %v2196
        %v2272 = vadd.f32 %v2271, %v2200
        %v2273 = vadd.f32 %v2272, %v2204
        %v2274 = vadd.f32 %v2273, %v2208
        %v2275 = vadd.f32 %v2274, %v2212
        %v2276 = vadd.f32 %v2275, %v2216
        %v2277 = vadd.f32 %v2276, %v2220
        %v2278 = vadd.f32 %v2277, %v2224
        %v2279 = vadd.f32 %v2278, %v2228
        %v2280 = vadd.f32 %v2279, %v2232
        %v2281 = vadd.f32 %v2280, %v2236
        %v2282 = vadd.f32 %v2281, %v2240
        %v2283 = vadd.f32 %v2282, %v2244
        %v2284 = vadd.f32 %v2283, %v2248
        %v2285 = vadd.f32 %v2284, %v2252
        %v2286 = vrot.slane %v2285, 4
        %v2287 = vadd.f32 %v2285, %v2286
        %v2288 = vrot.slane %v2287, 2
        %v2289 = vadd.f32 %v2287, %v2288
        %v2290 = vrot.slane %v2289, 1
        %v2291 = vadd.f32 %v2289, %v2290
        %v2292 = vadd.f32 %v2130, %v2134
        %v2293 = vadd.f32 %v2292, %v2138
        %v2294 = vadd.f32 %v2293, %v2142
        %v2295 = vadd.f32 %v2294, %v2146
        %v2296 = vadd.f32 %v2295, %v2150
        %v2297 = vadd.f32 %v2296, %v2154
        %v2298 = vadd.f32 %v2297, %v2158
        %v2299 = vadd.f32 %v2298, %v2162
        %v2300 = vadd.f32 %v2299, %v2166
        %v2301 = vadd.f32 %v2300, %v2170
        %v2302 = vadd.f32 %v2301, %v2174
        %v2303 = vadd.f32 %v2302, %v2178
        %v2304 = vadd.f32 %v2303, %v2182
        %v2305 = vadd.f32 %v2304, %v2186
        %v2306 = vadd.f32 %v2305, %v2190
        %v2307 = vadd.f32 %v2306, %v2194
        %v2308 = vadd.f32 %v2307, %v2198
        %v2309 = vadd.f32 %v2308, %v2202
        %v2310 = vadd.f32 %v2309, %v2206
        %v2311 = vadd.f32 %v2310, %v2210
        %v2312 = vadd.f32 %v2311, %v2214
        %v2313 = vadd.f32 %v2312, %v2218
        %v2314 = vadd.f32 %v2313, %v2222
        %v2315 = vadd.f32 %v2314, %v2226
        %v2316 = vadd.f32 %v2315, %v2230
        %v2317 = vadd.f32 %v2316, %v2234
        %v2318 = vadd.f32 %v2317, %v2238
        %v2319 = vadd.f32 %v2318, %v2242
        %v2320 = vadd.f32 %v2319, %v2246
        %v2321 = vadd.f32 %v2320, %v2250
        %v2322 = vadd.f32 %v2321, %v2254
        %v2323 = vrot.slane %v2322, 4
        %v2324 = vadd.f32 %v2322, %v2323
        %v2325 = vrot.slane %v2324, 2
        %v2326 = vadd.f32 %v2324, %v2325
        %v2327 = vrot.slane %v2326, 1
        %v2328 = vadd.f32 %v2326, %v2327
        %2329 = vmatpush.msra.mxu0 %v2188
        %2330 = vmatpush.msra.mxu0 %v2184
        %2331 = vmatpush.msra.mxu0 %v2180
        %2332 = vmatpush.msra.mxu0 %v2176
        %2333 = vmatpush.msra.mxu0 %v2172
        %2334 = vmatpush.msra.mxu0 %v2168
        %2335 = vmatpush.msra.mxu0 %v2164
        %2336 = vmatpush.msra.mxu0 %v2160
        %2337 = vmatpush.msra.mxu0 %v2156
        %2338 = vmatpush.msra.mxu0 %v2152
        %2339 = vmatpush.msra.mxu0 %v2148
        %2340 = vmatpush.msra.mxu0 %v2144
        %2341 = vmatpush.msra.mxu0 %v2140
        %2342 = vmatpush.msra.mxu0 %v2136
        %2343 = vmatpush.msra.mxu0 %v2132
        %2344 = vmatpush.msra.mxu0 %v2128
        %2345 = vmatmul.f32.gmra.mxu0 %v633
        %v2346 = vpop.f32.mrf.mxu0
        %v2347 = vadd.f32 0.0, %v2346
        %2348 = vdwg.mxu0
        %2349 = vmatpush.msra.mxu0 %v2252
        %2350 = vmatpush.msra.mxu0 %v2248
        %2351 = vmatpush.msra.mxu0 %v2244
        %2352 = vmatpush.msra.mxu0 %v2240
        %2353 = vmatpush.msra.mxu0 %v2236
        %2354 = vmatpush.msra.mxu0 %v2232
        %2355 = vmatpush.msra.mxu0 %v2228
        %2356 = vmatpush.msra.mxu0 %v2224
        %2357 = vmatpush.msra.mxu0 %v2220
        %2358 = vmatpush.msra.mxu0 %v2216
        %2359 = vmatpush.msra.mxu0 %v2212
        %2360 = vmatpush.msra.mxu0 %v2208
        %2361 = vmatpush.msra.mxu0 %v2204
        %2362 = vmatpush.msra.mxu0 %v2200
        %2363 = vmatpush.msra.mxu0 %v2196
        %2364 = vmatpush.msra.mxu0 %v2192
        %2365 = vmatmul.f32.gmra.mxu0 %v662
        %v2366 = vpop.f32.mrf.mxu0
        %v2367 = vadd.f32 %v2347, %v2366
        %2368 = vdwg.mxu0
        %2369 = vmatpush.msra.mxu0 %v2190
        %2370 = vmatpush.msra.mxu0 %v2186
        %2371 = vmatpush.msra.mxu0 %v2182
        %2372 = vmatpush.msra.mxu0 %v2178
        %2373 = vmatpush.msra.mxu0 %v2174
        %2374 = vmatpush.msra.mxu0 %v2170
        %2375 = vmatpush.msra.mxu0 %v2166
        %2376 = vmatpush.msra.mxu0 %v2162
        %2377 = vmatpush.msra.mxu0 %v2158
        %2378 = vmatpush.msra.mxu0 %v2154
        %2379 = vmatpush.msra.mxu0 %v2150
        %2380 = vmatpush.msra.mxu0 %v2146
        %2381 = vmatpush.msra.mxu0 %v2142
        %2382 = vmatpush.msra.mxu0 %v2138
        %2383 = vmatpush.msra.mxu0 %v2134
        %2384 = vmatpush.msra.mxu0 %v2130
        %2385 = vmatmul.f32.gmra.mxu0 %v633
        %v2386 = vpop.f32.mrf.mxu0
        %v2387 = vadd.f32 0.0, %v2386
        %2388 = vdwg.mxu0
        %2389 = vmatpush.msra.mxu0 %v2254
        %2390 = vmatpush.msra.mxu0 %v2250
        %2391 = vmatpush.msra.mxu0 %v2246
        %2392 = vmatpush.msra.mxu0 %v2242
        %2393 = vmatpush.msra.mxu0 %v2238
        %2394 = vmatpush.msra.mxu0 %v2234
        %2395 = vmatpush.msra.mxu0 %v2230
        %2396 = vmatpush.msra.mxu0 %v2226
        %2397 = vmatpush.msra.mxu0 %v2222
        %2398 = vmatpush.msra.mxu0 %v2218
        %2399 = vmatpush.msra.mxu0 %v2214
        %2400 = vmatpush.msra.mxu0 %v2210
        %2401 = vmatpush.msra.mxu0 %v2206
        %2402 = vmatpush.msra.mxu0 %v2202
        %2403 = vmatpush.msra.mxu0 %v2198
        %2404 = vmatpush.msra.mxu0 %v2194
        %2405 = vmatmul.f32.gmra.mxu0 %v662
        %v2406 = vpop.f32.mrf.mxu0
        %v2407 = vadd.f32 %v2387, %v2406
        %2408 = vdwg.mxu0
        %v2409 = vrcp.pop %v2291
        %v2410 = vrcp.pop %v2328
        %v2411 = vmul.f32 %v2367, %v2409
        %v2412 = vmul.f32 %v2407, %v2410
        %v2413 = vld [vmem:[%s475] sm:$0xf]
        %v2414 = vld [vmem:[%s479] sm:$0xf]
        %2416 = vset.pattern.permute.xlu0 0
        %2417 = vperm.xlu0 %2416, %v2414
        %v2418 = vpop.permute.xlu0 %2417
        %vm2420 = vcmask 130048
        %v2422 = vsel %vm2420, %v2413, 0
        %2424 = vmatpush.msra.mxu0 0.0
        %2425 = vmatpush.msra.mxu0 0.0
        %2426 = vmatpush.msra.mxu0 0.0
        %2427 = vmatpush.msra.mxu0 0.0
        %2428 = vmatpush.msra.mxu0 0.0
        %2429 = vmatpush.msra.mxu0 0.0
        %2430 = vmatpush.msra.mxu0 0.0
        %2431 = vmatpush.msra.mxu0 0.0
        %2432 = vmatpush.msra.mxu0 0.0
        %2433 = vmatpush.msra.mxu0 0.0
        %2434 = vmatpush.msra.mxu0 0.0
        %2435 = vmatpush.msra.mxu0 0.0
        %2436 = vmatpush.msra.mxu0 0.0
        %2437 = vmatpush.msra.mxu0 0.0
        %2438 = vmatpush.msra.mxu0 %v2411
        %2439 = vmatpush.msra.mxu0 %v1537
        %2440 = vmatmul.f32.gmra.mxu0 %v2422
        %v2441 = vpop.f32.mrf.mxu0
        %v2442 = vadd.f32 %v2418, %v2441
        %2443 = vdwg.mxu0
        %2444 = vmatpush.msra.mxu0 0.0
        %2445 = vmatpush.msra.mxu0 0.0
        %2446 = vmatpush.msra.mxu0 0.0
        %2447 = vmatpush.msra.mxu0 0.0
        %2448 = vmatpush.msra.mxu0 0.0
        %2449 = vmatpush.msra.mxu0 0.0
        %2450 = vmatpush.msra.mxu0 0.0
        %2451 = vmatpush.msra.mxu0 0.0
        %2452 = vmatpush.msra.mxu0 0.0
        %2453 = vmatpush.msra.mxu0 0.0
        %2454 = vmatpush.msra.mxu0 0.0
        %2455 = vmatpush.msra.mxu0 0.0
        %2456 = vmatpush.msra.mxu0 0.0
        %2457 = vmatpush.msra.mxu0 0.0
        %2458 = vmatpush.msra.mxu0 %v2412
        %2459 = vmatpush.msra.mxu0 %v1538
        %2460 = vmatmul.f32.gmra.mxu0 %v2422
        %v2461 = vpop.f32.mrf.mxu0
        %v2462 = vadd.f32 %v2418, %v2461
        %2463 = vdwg.mxu0
        %2464 = vst [vmem:[#allocation1] ss:$2 sm:$0xff] %v480
        %v2465 = vld.sshfl [vmem:[#allocation1] sm:$0xff pattern:$0x75316420]
        %v2466 = vld.sshfl [vmem:[#allocation1 + $0x8] sm:$0xff pattern:$0x75316420]
        %v2469 = vadd.f32 %v2442, %v2465
        %v2470 = vadd.f32 %v2462, %v2466
        %v2473 = vrot.slane %v2470, 4
        %v2474 = vsel %vm507, %v2469, %v2473
        %2476 = vst [vmem:[%s433] sm:$0xff] %v2474
        %s2477 = sand.u32 %s256, 1
        %s2478 = scalar_lea.sflag [#allocation3], %s2477
        %s2479 = sand.u32 %s256, 1
        %s2480 = smul.addr %s2479, 8
        %s2481 = scalar_lea.vmem [#allocation2], %s2480
        // Predicated region
        $region53: #{tpu_custom_call.1} parent=51 // pred_check
          %p2482 = pneg %p266
        $region54: #{tpu_custom_call.1} parent=51 // pred_check_branch
          %2484 = sbr.rel (%p2482) target = $region56
        $region55: #{tpu_custom_call.1} parent=51 // pred_region
          %2486 = vsyncadd %s2478, 0
          %s2487 = smul.addr %s27, 2
          %s2488 = smul.addr %s26, 4
          %s2489 = sadd.s32 %s2487, %s2488
          %s2490 = smul.addr %s2489, 4
          %s2491 = scalar_lea.hbm %s8, %s2490
          %s2493 = sshll.u32 %s2481, 4
          %s2494 = int_to_ptr.vmem [resolvable:$true] %s2493
          %s2495 = sshll.u32 %s2491, 4
          %s2496 = int_to_ptr.hbm [resolvable:$true] %s2495
          %2498 = dma.vmem_to_hbm [thread:$0]  %s2494, 128, %s2496, %s2478
        $region56: #{tpu_custom_call.1} parent=51 // pred_fallthru
          _
      $region52: #{tpu_custom_call.1} parent=5 // pred_fallthru
        _
      %p2499 = scmp.le.s32.totalorder 2, %s17
      // Predicated region
      $region57: #{tpu_custom_call.1} parent=5 // pred_check
        %p2500 = pneg %p2499
      $region58: #{tpu_custom_call.1} parent=5 // pred_check_branch
        %2502 = sbr.rel (%p2500) target = $region60
      $region59: #{tpu_custom_call.1} parent=5 // pred_region
        %s2503 = ssub.s32 %s17, 2
        // Predicated region
        $region61: #{tpu_custom_call.1} parent=59 // pred_check
          %p2504 = pneg %p272
        $region62: #{tpu_custom_call.1} parent=59 // pred_check_branch
          %2506 = sbr.rel (%p2504) target = $region64
        $region63: #{tpu_custom_call.1} parent=59 // pred_region
          %s2507 = sand.u32 %s257, 1
          %s2508 = scalar_lea.sflag [#allocation3], %s2507
          %s2509 = sand.u32 %s257, 1
          %s2510 = smul.addr %s2509, 8
          %s2511 = scalar_lea.vmem [#allocation2], %s2510
          %2513 = dma.done %s2508, 128
        $region64: #{tpu_custom_call.1} parent=59 // pred_fallthru
          _
      $region60: #{tpu_custom_call.1} parent=5 // pred_fallthru
        _
    $region6: #{tpu_custom_call.1} parent=1 // loop_footer
      %s21 = sadd.s32 1, %s17
    $region7: #{tpu_custom_call.1} parent=1 // loop_footer_branch
      %16 = sbr.rel target = $region3
    $region8: #{tpu_custom_call.1} parent=1 // loop_exit
      _
    %2514 = vsyncpa [#allocation3], 1
    %s2515 = scalar_lea.sflag [#allocation3], 1
    %2516 = vsyncpa %s2515, 1

</llo_original>
